<compile_context>
chip_gen: v6e
topology: v6e:2x2x1
jax: 0.10.0
libtpu: 0.0.40
codegen_flags: <defaults>
</compile_context>

<pallas_src>
import jax
import jax.numpy as jnp
from jax import lax
from jax.experimental import pallas as pl
from jax.experimental.pallas import tpu as pltpu

N_EMBD = 256


def _make_mha_kernel(num_heads, head_size):
    def kernel(x_ref, wqkv_ref, bqkv_ref, wpT_ref, bp_ref, o_ref):
        x = x_ref[0]                                   # (T, C)
        T, C = x.shape

        # Fused QKV projection for all heads: (T, C) @ (C, 3C) -> (T, 3C), lane-dense.
        qkv = jnp.dot(x, wqkv_ref[...], preferred_element_type=jnp.float32)
        qkv = qkv + bqkv_ref[...]                      # v-bias columns are zero

        scale = jnp.float32(C) ** -0.5                 # module scales by n_embd, not head_size

        head_outs = []
        for h in range(num_heads):                     # static unroll, H is small
            lo = h * head_size
            qh = qkv[:, lo:lo + head_size]             # (T, hs)
            kh = qkv[:, C + lo:C + lo + head_size]     # (T, hs)
            vh = qkv[:, 2 * C + lo:2 * C + lo + head_size]

            # q @ k^T without an explicit transpose: contract last axes of both.
            s = lax.dot_general(qh, kh, (((1,), (1,)), ((), ())),
                                preferred_element_type=jnp.float32) * scale  # (T, T)

            # numerically-stable softmax along last axis (f32 VPU/EUP math)
            m = jnp.max(s, axis=-1, keepdims=True)
            e = jnp.exp(s - m)
            denom = jnp.sum(e, axis=-1, keepdims=True)
            p = e * pl.reciprocal(denom, approx=True)  # EUP vrcp, free slot

            head_outs.append(jnp.dot(p, vh, preferred_element_type=jnp.float32))  # (T, hs)

        # Concatenate heads into one lane-dense (T, C) buffer, then ONE projection matmul.
        cat = jnp.concatenate(head_outs, axis=-1)      # (T, C)
        out = jnp.dot(cat, wpT_ref[...], preferred_element_type=jnp.float32) + bp_ref[...]
        o_ref[0] = out.astype(o_ref.dtype)

    return kernel


def multi_head_attention(x, params, *, num_heads, head_size):
    """x: (B, T, C) float32. Returns (B, T, C)."""
    B, T, C = x.shape
    assert C == N_EMBD and num_heads * head_size == N_EMBD

    wqkv = params["wqkv"]    # (C, 3C)  columns: [Q heads | K heads | V heads]
    bqkv = params["bqkv"]    # (1, 3C)  zeros in the V third (value has no bias)
    wpT = params["wpT"]      # (C, C)   == proj.weight.T, rows grouped per head
    bp = params["bp"]        # (1, C)

    kernel = _make_mha_kernel(num_heads, head_size)

    return pl.pallas_call(
        kernel,
        out_shape=jax.ShapeDtypeStruct((B, T, C), x.dtype),
        grid_spec=pltpu.PrefetchScalarGridSpec(
            num_scalar_prefetch=0,
            grid=(B,),
            in_specs=[
                pl.BlockSpec((1, T, C), lambda b: (b, 0, 0)),    # x (per batch)
                pl.BlockSpec((C, 3 * C), lambda b: (0, 0)),      # fused Wqkv (resident)
                pl.BlockSpec((1, 3 * C), lambda b: (0, 0)),      # fused bias
                pl.BlockSpec((C, C), lambda b: (0, 0)),          # proj weight^T
                pl.BlockSpec((1, C), lambda b: (0, 0)),          # proj bias
            ],
            out_specs=pl.BlockSpec((1, T, C), lambda b: (b, 0, 0)),
        ),
        compiler_params=pltpu.CompilerParams(
            dimension_semantics=("parallel",)),                  # v7x: one batch per TC
    )(x, wqkv, bqkv, wpT, bp)


def init_params(key, num_heads, head_size):
    C = N_EMBD
    ks = jax.random.split(key, 7)
    # PyTorch nn.Linear(in, out): y = x @ W^T + b, W:(out, in), init U(-1/sqrt(in), 1/sqrt(in)).
    # Per-head weights stored pre-transposed to (C, hs) so the kernel computes x @ W.
    u = 1.0 / jnp.sqrt(jnp.float32(C))
    wq = jax.random.uniform(ks[0], (num_heads, C, head_size), jnp.float32, -u, u)
    wk = jax.random.uniform(ks[1], (num_heads, C, head_size), jnp.float32, -u, u)
    wv = jax.random.uniform(ks[2], (num_heads, C, head_size), jnp.float32, -u, u)
    bq = jax.random.uniform(ks[3], (num_heads, head_size), jnp.float32, -u, u)
    bk = jax.random.uniform(ks[4], (num_heads, head_size), jnp.float32, -u, u)
    wp = jax.random.uniform(ks[5], (C, C), jnp.float32, -u, u)   # proj.weight (out, in)
    bp = jax.random.uniform(ks[6], (1, C), jnp.float32, -u, u)

    # Fuse per-head weights into one (C, 3C) matrix: [Q heads | K heads | V heads],
    # each third laid out head-major along the lanes (head h at columns h*hs:(h+1)*hs).
    wq_full = jnp.transpose(wq, (1, 0, 2)).reshape(C, num_heads * head_size)
    wk_full = jnp.transpose(wk, (1, 0, 2)).reshape(C, num_heads * head_size)
    wv_full = jnp.transpose(wv, (1, 0, 2)).reshape(C, num_heads * head_size)
    wqkv = jnp.concatenate([wq_full, wk_full, wv_full], axis=1)          # (C, 3C)

    bq_full = bq.reshape(1, num_heads * head_size)
    bk_full = bk.reshape(1, num_heads * head_size)
    bv_full = jnp.zeros((1, num_heads * head_size), jnp.float32)         # value: bias=False
    bqkv = jnp.concatenate([bq_full, bk_full, bv_full], axis=1)          # (1, 3C)

    return dict(
        # fused params (used by the kernel)
        wqkv=wqkv, bqkv=bqkv, wpT=wp.T, bp=bp,
        # unfused per-head params (used by the pure-JAX reference)
        wq=wq, wk=wk, wv=wv, bq=bq, bk=bk,
    )


def reference(x, params, num_heads, head_size):
    """Pure-JAX reference mirroring the PyTorch forward (eval mode), from unfused params."""
    C = x.shape[-1]
    outs = []
    for h in range(num_heads):
        q = x @ params["wq"][h] + params["bq"][h]
        k = x @ params["wk"][h] + params["bk"][h]
        v = x @ params["wv"][h]
        wei = (q @ jnp.swapaxes(k, -2, -1)) * (C ** -0.5)
        wei = jax.nn.softmax(wei, axis=-1)
        outs.append(wei @ v)
    cat = jnp.concatenate(outs, axis=-1)
    return cat @ params["wpT"] + params["bp"]


if __name__ == "__main__":
    B, T = 2, 8
    num_heads, head_size = 4, 64          # num_heads * head_size == n_embd == 256

    key = jax.random.PRNGKey(0)
    kx, kp = jax.random.split(key)
    x = jax.random.normal(kx, (B, T, N_EMBD), jnp.float32)
    params = init_params(kp, num_heads, head_size)

    out = multi_head_attention(x, params, num_heads=num_heads, head_size=head_size)
    out = jax.block_until_ready(out)

    ref = reference(x, params, num_heads, head_size)
    assert out.shape == (B, T, N_EMBD)
    # tolerance loosened slightly vs pure-f32 to admit the EUP approximate reciprocal
    assert jnp.allclose(out, ref, atol=2e-3, rtol=2e-3), \
        f"max abs err {jnp.max(jnp.abs(out - ref))}"

    print("KERNEL_OK")
</pallas_src>

<mosaic_0001>
module attributes {stable_mosaic.version = 11 : i64} {
  func.func @kernel(%arg0: i32, %arg1: memref<1x8x256xf32, #tpu.memory_space<vmem>>, %arg2: memref<256x768xf32, #tpu.memory_space<vmem>>, %arg3: memref<1x768xf32, #tpu.memory_space<vmem>>, %arg4: memref<256x256xf32, #tpu.memory_space<vmem>>, %arg5: memref<1x256xf32, #tpu.memory_space<vmem>>, %arg6: memref<1x8x256xf32, #tpu.memory_space<vmem>>) attributes {dimension_semantics = [#tpu.dimension_semantics<parallel>], iteration_bounds = array<i64: 2>, scalar_prefetch = 0 : i64, scratch_operands = 0 : i64, tpu.core_type = #tpu.core_type<tc>, window_params = [{transform_indices = @transform_0, window_bounds = array<i64: 1, 8, 256>}, {pipeline_mode = #tpu.pipeline_mode<synchronous>, transform_indices = @transform_1, window_bounds = array<i64: 256, 768>}, {pipeline_mode = #tpu.pipeline_mode<synchronous>, transform_indices = @transform_2, window_bounds = array<i64: 1, 768>}, {pipeline_mode = #tpu.pipeline_mode<synchronous>, transform_indices = @transform_3, window_bounds = array<i64: 256, 256>}, {pipeline_mode = #tpu.pipeline_mode<synchronous>, transform_indices = @transform_4, window_bounds = array<i64: 1, 256>}, {transform_indices = @transform_5, window_bounds = array<i64: 1, 8, 256>}]} {
    %c0 = arith.constant 0 : index
    %c0_0 = arith.constant 0 : index
    %c0_1 = arith.constant 0 : index
    %0 = vector.load %arg1[%c0, %c0_0, %c0_1] : memref<1x8x256xf32, #tpu.memory_space<vmem>>, vector<1x8x256xf32>
    %1 = vector.shape_cast %0 : vector<1x8x256xf32> to vector<8x256xf32>
    %c0_2 = arith.constant 0 : index
    %c0_3 = arith.constant 0 : index
    %2 = vector.load %arg2[%c0_2, %c0_3] : memref<256x768xf32, #tpu.memory_space<vmem>>, vector<256x768xf32>
    %cst = arith.constant dense<0.000000e+00> : vector<8x768xf32>
    %3 = tpu.matmul %1, %2, %cst {dimension_numbers = #tpu.dot_dimension_numbers<[1], [0], [0], [1], [0, 0, 1, 1], [], []>} : vector<8x256xf32>, vector<256x768xf32>, vector<8x768xf32> -> vector<8x768xf32>
    %c0_4 = arith.constant 0 : index
    %c0_5 = arith.constant 0 : index
    %4 = vector.load %arg3[%c0_4, %c0_5] : memref<1x768xf32, #tpu.memory_space<vmem>>, vector<1x768xf32>
    %5 = vector.broadcast %4 : vector<1x768xf32> to vector<8x768xf32>
    %6 = arith.addf %3, %5 : vector<8x768xf32>
    %cst_6 = arith.constant 2.560000e+02 : f32
    %cst_7 = arith.constant -5.000000e-01 : f32
    %7 = math.powf %cst_6, %cst_7 : f32
    %8 = vector.extract_strided_slice %6 {offsets = [0, 0], sizes = [8, 64], strides = [1, 1]} : vector<8x768xf32> to vector<8x64xf32>
    %9 = vector.extract_strided_slice %6 {offsets = [0, 256], sizes = [8, 64], strides = [1, 1]} : vector<8x768xf32> to vector<8x64xf32>
    %10 = vector.extract_strided_slice %6 {offsets = [0, 512], sizes = [8, 64], strides = [1, 1]} : vector<8x768xf32> to vector<8x64xf32>
    %cst_8 = arith.constant dense<0.000000e+00> : vector<8x8xf32>
    %11 = tpu.matmul %8, %9, %cst_8 {dimension_numbers = #tpu.dot_dimension_numbers<[1], [1], [0], [0], [0, 0, 1, 0], [], []>} : vector<8x64xf32>, vector<8x64xf32>, vector<8x8xf32> -> vector<8x8xf32>
    %12 = vector.broadcast %7 : f32 to vector<8x8xf32>
    %13 = arith.mulf %11, %12 : vector<8x8xf32>
    %cst_9 = arith.constant dense<0xFF800000> : vector<8xf32>
    %14 = vector.multi_reduction <maximumf>, %13, %cst_9 [1] : vector<8x8xf32> to vector<8xf32>
    %15 = vector.shape_cast %14 : vector<8xf32> to vector<8x1xf32>
    %16 = vector.broadcast %15 : vector<8x1xf32> to vector<8x8xf32>
    %17 = arith.subf %13, %16 : vector<8x8xf32>
    %18 = math.exp %17 : vector<8x8xf32>
    %cst_10 = arith.constant dense<0.000000e+00> : vector<8xf32>
    %19 = vector.multi_reduction <add>, %18, %cst_10 [1] : vector<8x8xf32> to vector<8xf32>
    %20 = vector.shape_cast %19 : vector<8xf32> to vector<8x1xf32>
    %21 = tpu.reciprocal %20 {approx = true} : vector<8x1xf32> -> vector<8x1xf32>
    %22 = vector.broadcast %21 : vector<8x1xf32> to vector<8x8xf32>
    %23 = arith.mulf %18, %22 : vector<8x8xf32>
    %cst_11 = arith.constant dense<0.000000e+00> : vector<8x64xf32>
    %24 = tpu.matmul %23, %10, %cst_11 {dimension_numbers = #tpu.dot_dimension_numbers<[1], [0], [0], [1], [0, 0, 1, 1], [], []>} : vector<8x8xf32>, vector<8x64xf32>, vector<8x64xf32> -> vector<8x64xf32>
    %25 = vector.extract_strided_slice %6 {offsets = [0, 64], sizes = [8, 64], strides = [1, 1]} : vector<8x768xf32> to vector<8x64xf32>
    %26 = vector.extract_strided_slice %6 {offsets = [0, 320], sizes = [8, 64], strides = [1, 1]} : vector<8x768xf32> to vector<8x64xf32>
    %27 = vector.extract_strided_slice %6 {offsets = [0, 576], sizes = [8, 64], strides = [1, 1]} : vector<8x768xf32> to vector<8x64xf32>
    %cst_12 = arith.constant dense<0.000000e+00> : vector<8x8xf32>
    %28 = tpu.matmul %25, %26, %cst_12 {dimension_numbers = #tpu.dot_dimension_numbers<[1], [1], [0], [0], [0, 0, 1, 0], [], []>} : vector<8x64xf32>, vector<8x64xf32>, vector<8x8xf32> -> vector<8x8xf32>
    %29 = vector.broadcast %7 : f32 to vector<8x8xf32>
    %30 = arith.mulf %28, %29 : vector<8x8xf32>
    %cst_13 = arith.constant dense<0xFF800000> : vector<8xf32>
    %31 = vector.multi_reduction <maximumf>, %30, %cst_13 [1] : vector<8x8xf32> to vector<8xf32>
    %32 = vector.shape_cast %31 : vector<8xf32> to vector<8x1xf32>
    %33 = vector.broadcast %32 : vector<8x1xf32> to vector<8x8xf32>
    %34 = arith.subf %30, %33 : vector<8x8xf32>
    %35 = math.exp %34 : vector<8x8xf32>
    %cst_14 = arith.constant dense<0.000000e+00> : vector<8xf32>
    %36 = vector.multi_reduction <add>, %35, %cst_14 [1] : vector<8x8xf32> to vector<8xf32>
    %37 = vector.shape_cast %36 : vector<8xf32> to vector<8x1xf32>
    %38 = tpu.reciprocal %37 {approx = true} : vector<8x1xf32> -> vector<8x1xf32>
    %39 = vector.broadcast %38 : vector<8x1xf32> to vector<8x8xf32>
    %40 = arith.mulf %35, %39 : vector<8x8xf32>
    %cst_15 = arith.constant dense<0.000000e+00> : vector<8x64xf32>
    %41 = tpu.matmul %40, %27, %cst_15 {dimension_numbers = #tpu.dot_dimension_numbers<[1], [0], [0], [1], [0, 0, 1, 1], [], []>} : vector<8x8xf32>, vector<8x64xf32>, vector<8x64xf32> -> vector<8x64xf32>
    %42 = vector.extract_strided_slice %6 {offsets = [0, 128], sizes = [8, 64], strides = [1, 1]} : vector<8x768xf32> to vector<8x64xf32>
    %43 = vector.extract_strided_slice %6 {offsets = [0, 384], sizes = [8, 64], strides = [1, 1]} : vector<8x768xf32> to vector<8x64xf32>
    %44 = vector.extract_strided_slice %6 {offsets = [0, 640], sizes = [8, 64], strides = [1, 1]} : vector<8x768xf32> to vector<8x64xf32>
    %cst_16 = arith.constant dense<0.000000e+00> : vector<8x8xf32>
    %45 = tpu.matmul %42, %43, %cst_16 {dimension_numbers = #tpu.dot_dimension_numbers<[1], [1], [0], [0], [0, 0, 1, 0], [], []>} : vector<8x64xf32>, vector<8x64xf32>, vector<8x8xf32> -> vector<8x8xf32>
    %46 = vector.broadcast %7 : f32 to vector<8x8xf32>
    %47 = arith.mulf %45, %46 : vector<8x8xf32>
    %cst_17 = arith.constant dense<0xFF800000> : vector<8xf32>
    %48 = vector.multi_reduction <maximumf>, %47, %cst_17 [1] : vector<8x8xf32> to vector<8xf32>
    %49 = vector.shape_cast %48 : vector<8xf32> to vector<8x1xf32>
    %50 = vector.broadcast %49 : vector<8x1xf32> to vector<8x8xf32>
    %51 = arith.subf %47, %50 : vector<8x8xf32>
    %52 = math.exp %51 : vector<8x8xf32>
    %cst_18 = arith.constant dense<0.000000e+00> : vector<8xf32>
    %53 = vector.multi_reduction <add>, %52, %cst_18 [1] : vector<8x8xf32> to vector<8xf32>
    %54 = vector.shape_cast %53 : vector<8xf32> to vector<8x1xf32>
    %55 = tpu.reciprocal %54 {approx = true} : vector<8x1xf32> -> vector<8x1xf32>
    %56 = vector.broadcast %55 : vector<8x1xf32> to vector<8x8xf32>
    %57 = arith.mulf %52, %56 : vector<8x8xf32>
    %cst_19 = arith.constant dense<0.000000e+00> : vector<8x64xf32>
    %58 = tpu.matmul %57, %44, %cst_19 {dimension_numbers = #tpu.dot_dimension_numbers<[1], [0], [0], [1], [0, 0, 1, 1], [], []>} : vector<8x8xf32>, vector<8x64xf32>, vector<8x64xf32> -> vector<8x64xf32>
    %59 = vector.extract_strided_slice %6 {offsets = [0, 192], sizes = [8, 64], strides = [1, 1]} : vector<8x768xf32> to vector<8x64xf32>
    %60 = vector.extract_strided_slice %6 {offsets = [0, 448], sizes = [8, 64], strides = [1, 1]} : vector<8x768xf32> to vector<8x64xf32>
    %61 = vector.extract_strided_slice %6 {offsets = [0, 704], sizes = [8, 64], strides = [1, 1]} : vector<8x768xf32> to vector<8x64xf32>
    %cst_20 = arith.constant dense<0.000000e+00> : vector<8x8xf32>
    %62 = tpu.matmul %59, %60, %cst_20 {dimension_numbers = #tpu.dot_dimension_numbers<[1], [1], [0], [0], [0, 0, 1, 0], [], []>} : vector<8x64xf32>, vector<8x64xf32>, vector<8x8xf32> -> vector<8x8xf32>
    %63 = vector.broadcast %7 : f32 to vector<8x8xf32>
    %64 = arith.mulf %62, %63 : vector<8x8xf32>
    %cst_21 = arith.constant dense<0xFF800000> : vector<8xf32>
    %65 = vector.multi_reduction <maximumf>, %64, %cst_21 [1] : vector<8x8xf32> to vector<8xf32>
    %66 = vector.shape_cast %65 : vector<8xf32> to vector<8x1xf32>
    %67 = vector.broadcast %66 : vector<8x1xf32> to vector<8x8xf32>
    %68 = arith.subf %64, %67 : vector<8x8xf32>
    %69 = math.exp %68 : vector<8x8xf32>
    %cst_22 = arith.constant dense<0.000000e+00> : vector<8xf32>
    %70 = vector.multi_reduction <add>, %69, %cst_22 [1] : vector<8x8xf32> to vector<8xf32>
    %71 = vector.shape_cast %70 : vector<8xf32> to vector<8x1xf32>
    %72 = tpu.reciprocal %71 {approx = true} : vector<8x1xf32> -> vector<8x1xf32>
    %73 = vector.broadcast %72 : vector<8x1xf32> to vector<8x8xf32>
    %74 = arith.mulf %69, %73 : vector<8x8xf32>
    %cst_23 = arith.constant dense<0.000000e+00> : vector<8x64xf32>
    %75 = tpu.matmul %74, %61, %cst_23 {dimension_numbers = #tpu.dot_dimension_numbers<[1], [0], [0], [1], [0, 0, 1, 1], [], []>} : vector<8x8xf32>, vector<8x64xf32>, vector<8x64xf32> -> vector<8x64xf32>
    %76 = tpu.concatenate %24, %41, %58, %75 in 1 : vector<8x64xf32>, vector<8x64xf32>, vector<8x64xf32>, vector<8x64xf32> -> vector<8x256xf32>
    %c0_24 = arith.constant 0 : index
    %c0_25 = arith.constant 0 : index
    %77 = vector.load %arg4[%c0_24, %c0_25] : memref<256x256xf32, #tpu.memory_space<vmem>>, vector<256x256xf32>
    %cst_26 = arith.constant dense<0.000000e+00> : vector<8x256xf32>
    %78 = tpu.matmul %76, %77, %cst_26 {dimension_numbers = #tpu.dot_dimension_numbers<[1], [0], [0], [1], [0, 0, 1, 1], [], []>} : vector<8x256xf32>, vector<256x256xf32>, vector<8x256xf32> -> vector<8x256xf32>
    %c0_27 = arith.constant 0 : index
    %c0_28 = arith.constant 0 : index
    %79 = vector.load %arg5[%c0_27, %c0_28] : memref<1x256xf32, #tpu.memory_space<vmem>>, vector<1x256xf32>
    %80 = vector.broadcast %79 : vector<1x256xf32> to vector<8x256xf32>
    %81 = arith.addf %78, %80 : vector<8x256xf32>
    %c0_29 = arith.constant 0 : index
    %c0_30 = arith.constant 0 : index
    %c0_31 = arith.constant 0 : index
    %82 = vector.load %arg6[%c0_29, %c0_30, %c0_31] : memref<1x8x256xf32, #tpu.memory_space<vmem>>, vector<1x8x256xf32>
    %83 = vector.shape_cast %82 : vector<1x8x256xf32> to vector<8x256xf32>
    %84 = vector.shape_cast %81 : vector<8x256xf32> to vector<1x8x256xf32>
    tpu.vector_store %arg6[%c0_29, %c0_30, %c0_31], %84 {strides = array<i32>} : memref<1x8x256xf32, #tpu.memory_space<vmem>>, vector<1x8x256xf32>,
    return
  }
  func.func @transform_0(%arg0: i32) -> (i32, i32, i32) {
    %c0_i32 = arith.constant 0 : i32
    %c0_i32_0 = arith.constant 0 : i32
    %c0_i32_1 = arith.constant 0 : i32
    return %arg0, %c0_i32, %c0_i32_0 : i32, i32, i32
  }
  func.func @transform_1(%arg0: i32) -> (i32, i32) {
    %c0_i32 = arith.constant 0 : i32
    %c0_i32_0 = arith.constant 0 : i32
    %c0_i32_1 = arith.constant 0 : i32
    return %c0_i32, %c0_i32_0 : i32, i32
  }
  func.func @transform_2(%arg0: i32) -> (i32, i32) {
    %c0_i32 = arith.constant 0 : i32
    %c0_i32_0 = arith.constant 0 : i32
    %c0_i32_1 = arith.constant 0 : i32
    return %c0_i32, %c0_i32_0 : i32, i32
  }
  func.func @transform_3(%arg0: i32) -> (i32, i32) {
    %c0_i32 = arith.constant 0 : i32
    %c0_i32_0 = arith.constant 0 : i32
    %c0_i32_1 = arith.constant 0 : i32
    return %c0_i32, %c0_i32_0 : i32, i32
  }
  func.func @transform_4(%arg0: i32) -> (i32, i32) {
    %c0_i32 = arith.constant 0 : i32
    %c0_i32_0 = arith.constant 0 : i32
    %c0_i32_1 = arith.constant 0 : i32
    return %c0_i32, %c0_i32_0 : i32, i32
  }
  func.func @transform_5(%arg0: i32) -> (i32, i32, i32) {
    %c0_i32 = arith.constant 0 : i32
    %c0_i32_0 = arith.constant 0 : i32
    %c0_i32_1 = arith.constant 0 : i32
    return %arg0, %c0_i32, %c0_i32_0 : i32, i32, i32
  }
}

</mosaic_0001>

<llo_original>
// kernel: tpu_custom_call.1
$region0: #{tpu_custom_call.1}
  #allocation0 [shape = 'u32[]', space=smem, size = 0x4, offset = 0x4, fixed_abs, tag = 'smem constant byte address 0x4 - core index']
  #allocation1 [shape = 'u32[144,128]{1,0:T(1,128)}', space=vmem, size = 0x12000, scoped, tag = 'internal scratch']
  %s0 = inlined_call_operand.hbm [shape: f32[2,8,256], index: 0, kind: input, shape index: {}]
  %s1 = inlined_call_operand.hbm [shape: f32[256,768], index: 1, kind: input, shape index: {}]
  %s2 = inlined_call_operand.hbm [shape: f32[1,768], index: 2, kind: input, shape index: {}]
  %s3 = inlined_call_operand.hbm [shape: f32[256,256], index: 3, kind: input, shape index: {}]
  %s4 = inlined_call_operand.vmem [shape: f32[1,256], index: 4, kind: input, shape index: {}]
  %s5 = inlined_call_operand.hbm [shape: f32[2,8,256], index: 5, kind: output, shape index: {}]
  %s6 = sld [smem:[#allocation0]]
  $region69: #{tpu_custom_call.1} parent=0
    _
  %s8 = ssub.s32 1, %s6
  %s9 = scalar_select 0, %s8, %s6
  $region1: #{tpu_custom_call.1} parent=0
    #allocation2 [shape = 'u8[16384]{0}', space=vmem, size = 0x4000, scoped, tag = 'input window, operand 0']
    #allocation3 [shape = 's32[2]{0}', space=sflag, size = 0x8, scoped, tag = 'scoped memory for tpu_custom_call.1']
    #allocation4 [shape = 's32[2]{0}', space=sflag, size = 0x8, scoped, tag = 'scoped memory for tpu_custom_call.1']
    #allocation5 [shape = 'u8[786432]{0}', space=vmem, size = 0xc0000, scoped, tag = 'input window, operand 1, single buffered']
    #allocation6 [shape = 's32[1]{0}', space=sflag, size = 0x4, scoped, tag = 'scoped memory for tpu_custom_call.1']
    #allocation7 [shape = 'u8[3072]{0}', space=vmem, size = 0xc00, scoped, tag = 'input window, operand 2, single buffered']
    #allocation8 [shape = 'u8[262144]{0}', space=vmem, size = 0x40000, scoped, tag = 'input window, operand 3, single buffered']
    #allocation9 [shape = 's32[1]{0}', space=sflag, size = 0x4, scoped, tag = 'scoped memory for tpu_custom_call.1']
    #allocation10 [shape = 'u8[16384]{0}', space=vmem, size = 0x4000, scoped, tag = 'output window, operand 0']
    %10 = vsyncpa [#allocation3], 0
    %s11 = scalar_lea.sflag [#allocation3], 1
    %12 = vsyncpa %s11, 0
    %13 = vsyncpa [#allocation6], 0
    %14 = vsyncpa [#allocation9], 0
    %15 = vsyncpa [#allocation4], 0
    %s16 = scalar_lea.sflag [#allocation4], 1
    %17 = vsyncpa %s16, 0
    loop: start=0, step=1, limit=4
    $region2: #{tpu_custom_call.1} parent=1 // loop_pre_header
      _
    $region3: #{tpu_custom_call.1} parent=1 // loop_header
      %s19 = sphi 0, %s23
      %p20 = scmp.ge.s32.totalorder %s19, 4
      %s29 = sphi 0, %s31
      %s32 = sphi 0, %s29
      %s33 = sphi 0, %s32
      %s49 = sphi 0, %s33
      %s53 = sphi 0, %s53
      %s55 = sphi 0, %s53
      %s56 = sphi 0, %s55
      %s70 = sphi 0, %s56
      %s74 = sphi 0, %s74
      %s76 = sphi 0, %s74
      %s77 = sphi 0, %s76
      %s91 = sphi 0, %s77
      %s95 = sphi 0, %s95
      %s97 = sphi 0, %s95
      %s98 = sphi 0, %s97
      %s112 = sphi 0, %s98
      %s116 = sphi 0, %s116
      %s118 = sphi 0, %s116
      %s119 = sphi 0, %s118
      %s133 = sphi 0, %s119
      %s139 = sphi 0, %s141
      %s142 = sphi 0, %s139
      %s143 = sphi 0, %s142
      %s159 = sphi 0, %s143
    $region4: #{tpu_custom_call.1} parent=1 // loop_header_branch
      %22 = sbr.rel (%p20) target = $region8
    $region5: #{tpu_custom_call.1} parent=1 // loop_body
      %s24 = ssub.s32 %s19, 1
      %s25 = ssub.s32 %s19, 2
      %s26 = sadd.s32 %s19, 1
      %s27 = ssub.s32 %s19, %s26
      %p28 = scmp.eq.s32.totalorder %s27, 0
      %s30 = sadd.s32 %s29, 1
      %s31 = scalar_select %p28, %s29, %s30
      %p34 = pneg %p28
      %p35 = scmp.eq.s32.totalorder %s19, 1
      %p36 = por %p34, %p35
      %p37 = scmp.ne.s32.totalorder %s29, %s32
      %p38 = scmp.eq.s32.totalorder %s19, 0
      %p39 = por %p37, %p38
      %p40 = scmp.ne.s32.totalorder %s29, %s32
      %p41 = scmp.eq.s32.totalorder %s24, 1
      %p42 = por %p40, %p41
      %p43 = scmp.ne.s32.totalorder %s32, %s33
      %p44 = scmp.eq.s32.totalorder %s24, 0
      %p45 = por %p43, %p44
      %p46 = scmp.ne.s32.totalorder %s32, %s33
      %p47 = scmp.eq.s32.totalorder %s25, 1
      %p48 = por %p46, %p47
      %p50 = scmp.ne.s32.totalorder %s33, %s49
      %p51 = scmp.eq.s32.totalorder %s25, 0
      %p52 = por %p50, %p51
      %s54 = sadd.s32 %s53, 1
      %p57 = scmp.eq.s32.totalorder %s19, 1
      %p58 = scmp.ne.s32.totalorder %s53, %s55
      %p59 = scmp.eq.s32.totalorder %s19, 0
      %p60 = por %p58, %p59
      %p61 = scmp.ne.s32.totalorder %s53, %s55
      %p62 = scmp.eq.s32.totalorder %s24, 1
      %p63 = por %p61, %p62
      %p64 = scmp.ne.s32.totalorder %s55, %s56
      %p65 = scmp.eq.s32.totalorder %s24, 0
      %p66 = por %p64, %p65
      %p67 = scmp.ne.s32.totalorder %s55, %s56
      %p68 = scmp.eq.s32.totalorder %s25, 1
      %p69 = por %p67, %p68
      %p71 = scmp.ne.s32.totalorder %s56, %s70
      %p72 = scmp.eq.s32.totalorder %s25, 0
      %p73 = por %p71, %p72
      %s75 = sadd.s32 %s74, 1
      %p78 = scmp.eq.s32.totalorder %s19, 1
      %p79 = scmp.ne.s32.totalorder %s74, %s76
      %p80 = scmp.eq.s32.totalorder %s19, 0
      %p81 = por %p79, %p80
      %p82 = scmp.ne.s32.totalorder %s74, %s76
      %p83 = scmp.eq.s32.totalorder %s24, 1
      %p84 = por %p82, %p83
      %p85 = scmp.ne.s32.totalorder %s76, %s77
      %p86 = scmp.eq.s32.totalorder %s24, 0
      %p87 = por %p85, %p86
      %p88 = scmp.ne.s32.totalorder %s76, %s77
      %p89 = scmp.eq.s32.totalorder %s25, 1
      %p90 = por %p88, %p89
      %p92 = scmp.ne.s32.totalorder %s77, %s91
      %p93 = scmp.eq.s32.totalorder %s25, 0
      %p94 = por %p92, %p93
      %s96 = sadd.s32 %s95, 1
      %p99 = scmp.eq.s32.totalorder %s19, 1
      %p100 = scmp.ne.s32.totalorder %s95, %s97
      %p101 = scmp.eq.s32.totalorder %s19, 0
      %p102 = por %p100, %p101
      %p103 = scmp.ne.s32.totalorder %s95, %s97
      %p104 = scmp.eq.s32.totalorder %s24, 1
      %p105 = por %p103, %p104
      %p106 = scmp.ne.s32.totalorder %s97, %s98
      %p107 = scmp.eq.s32.totalorder %s24, 0
      %p108 = por %p106, %p107
      %p109 = scmp.ne.s32.totalorder %s97, %s98
      %p110 = scmp.eq.s32.totalorder %s25, 1
      %p111 = por %p109, %p110
      %p113 = scmp.ne.s32.totalorder %s98, %s112
      %p114 = scmp.eq.s32.totalorder %s25, 0
      %p115 = por %p113, %p114
      %s117 = sadd.s32 %s116, 1
      %p120 = scmp.eq.s32.totalorder %s19, 1
      %p121 = scmp.ne.s32.totalorder %s116, %s118
      %p122 = scmp.eq.s32.totalorder %s19, 0
      %p123 = por %p121, %p122
      %p124 = scmp.ne.s32.totalorder %s116, %s118
      %p125 = scmp.eq.s32.totalorder %s24, 1
      %p126 = por %p124, %p125
      %p127 = scmp.ne.s32.totalorder %s118, %s119
      %p128 = scmp.eq.s32.totalorder %s24, 0
      %p129 = por %p127, %p128
      %p130 = scmp.ne.s32.totalorder %s118, %s119
      %p131 = scmp.eq.s32.totalorder %s25, 1
      %p132 = por %p130, %p131
      %p134 = scmp.ne.s32.totalorder %s119, %s133
      %p135 = scmp.eq.s32.totalorder %s25, 0
      %p136 = por %p134, %p135
      %s137 = ssub.s32 %s19, %s26
      %p138 = scmp.eq.s32.totalorder %s137, 0
      %s140 = sadd.s32 %s139, 1
      %s141 = scalar_select %p138, %s139, %s140
      %p144 = pneg %p138
      %p145 = scmp.eq.s32.totalorder %s19, 1
      %p146 = por %p144, %p145
      %p147 = scmp.ne.s32.totalorder %s139, %s142
      %p148 = scmp.eq.s32.totalorder %s19, 0
      %p149 = por %p147, %p148
      %p150 = scmp.ne.s32.totalorder %s139, %s142
      %p151 = scmp.eq.s32.totalorder %s24, 1
      %p152 = por %p150, %p151
      %p153 = scmp.ne.s32.totalorder %s142, %s143
      %p154 = scmp.eq.s32.totalorder %s24, 0
      %p155 = por %p153, %p154
      %p156 = scmp.ne.s32.totalorder %s142, %s143
      %p157 = scmp.eq.s32.totalorder %s25, 1
      %p158 = por %p156, %p157
      %p160 = scmp.ne.s32.totalorder %s143, %s159
      %p161 = scmp.eq.s32.totalorder %s25, 0
      %p162 = por %p160, %p161
      %p163 = scmp.le.s32.totalorder 1, %s19
      %p164 = scmp.lt.s32.totalorder %s19, 3
      %p165 = pnand %p163, %p164
      %p166 = pneg %p165
      // Predicated region
      $region9: #{tpu_custom_call.1} parent=5 // pred_check
        _
      $region10: #{tpu_custom_call.1} parent=5 // pred_check_branch
        %168 = sbr.rel (%p165) target = $region12
      $region11: #{tpu_custom_call.1} parent=5 // pred_region
        %s169 = ssub.s32 %s19, 1
        // Predicated region
        $region13: #{tpu_custom_call.1} parent=11 // pred_check
          %p170 = pneg %p66
        $region14: #{tpu_custom_call.1} parent=11 // pred_check_branch
          %172 = sbr.rel (%p170) target = $region16
        $region15: #{tpu_custom_call.1} parent=11 // pred_region
          %s174 = ssub.s32 24576, 24576
          %175 = vsyncadd [#allocation6], %s174
          %s176 = sshll.u32 [#allocation5], 4
          %s177 = int_to_ptr.vmem [resolvable:$true] %s176
          %182 = dma.hbm_to_vmem [thread:$0]  %s1, 24576, %s177, [#allocation6], 768, 768, 48
        $region16: #{tpu_custom_call.1} parent=11 // pred_fallthru
          _
        // Predicated region
        $region17: #{tpu_custom_call.1} parent=11 // pred_check
          %p183 = pneg %p87
        $region18: #{tpu_custom_call.1} parent=11 // pred_check_branch
          %185 = sbr.rel (%p183) target = $region20
        $region19: #{tpu_custom_call.1} parent=11 // pred_region
          %s187 = ssub.s32 96, 96
          %188 = vsyncadd [#allocation6], %s187
          %s190 = sshll.u32 [#allocation7], 4
          %s191 = int_to_ptr.vmem [resolvable:$true] %s190
          %193 = dma.hbm_to_vmem [thread:$0]  %s2, 96, %s191, [#allocation6]
        $region20: #{tpu_custom_call.1} parent=11 // pred_fallthru
          _
        // Predicated region
        $region21: #{tpu_custom_call.1} parent=11 // pred_check
          %p194 = pneg %p108
        $region22: #{tpu_custom_call.1} parent=11 // pred_check_branch
          %196 = sbr.rel (%p194) target = $region24
        $region23: #{tpu_custom_call.1} parent=11 // pred_region
          %s198 = ssub.s32 8192, 8192
          %199 = vsyncadd [#allocation9], %s198
          %s200 = sshll.u32 [#allocation8], 4
          %s201 = int_to_ptr.vmem [resolvable:$true] %s200
          %206 = dma.hbm_to_vmem [thread:$0]  %s3, 8192, %s201, [#allocation9], 256, 256, 16
        $region24: #{tpu_custom_call.1} parent=11 // pred_fallthru
          _
        // Predicated region
        $region25: #{tpu_custom_call.1} parent=11 // pred_check
          %p207 = pneg %p129
        $region26: #{tpu_custom_call.1} parent=11 // pred_check_branch
          %209 = sbr.rel (%p207) target = $region28
        $region27: #{tpu_custom_call.1} parent=11 // pred_region
          _
        $region28: #{tpu_custom_call.1} parent=11 // pred_fallthru
          _
      $region12: #{tpu_custom_call.1} parent=5 // pred_fallthru
        _
      %p210 = scmp.lt.s32.totalorder %s19, 2
      // Predicated region
      $region29: #{tpu_custom_call.1} parent=5 // pred_check
        %p211 = pneg %p210
      $region30: #{tpu_custom_call.1} parent=5 // pred_check_branch
        %213 = sbr.rel (%p211) target = $region32
      $region31: #{tpu_custom_call.1} parent=5 // pred_region
        // Predicated region
        $region33: #{tpu_custom_call.1} parent=31 // pred_check
          %p214 = pneg %p39
        $region34: #{tpu_custom_call.1} parent=31 // pred_check_branch
          %216 = sbr.rel (%p214) target = $region36
        $region35: #{tpu_custom_call.1} parent=31 // pred_region
          %s217 = sand.u32 %s29, 1
          %s218 = scalar_lea.sflag [#allocation3], %s217
          %s219 = sand.u32 %s29, 1
          %s220 = smul.addr %s219, 16
          %s221 = scalar_lea.vmem [#allocation2], %s220
          %s223 = ssub.s32 256, 256
          %224 = vsyncadd %s218, %s223
          %s225 = smul.addr %s19, 2
          %s226 = smul.addr %s225, 128
          %s227 = scalar_lea.hbm %s0, %s226
          %s229 = sshll.u32 %s221, 4
          %s230 = int_to_ptr.vmem [resolvable:$true] %s229
          %232 = dma.hbm_to_vmem [thread:$0]  %s227, 256, %s230, %s218
        $region36: #{tpu_custom_call.1} parent=31 // pred_fallthru
          _
      $region32: #{tpu_custom_call.1} parent=5 // pred_fallthru
        _
      %p233 = scmp.le.s32.totalorder 1, %s19
      %p234 = scmp.lt.s32.totalorder %s19, 3
      %p235 = pnand %p233, %p234
      %p236 = pneg %p235
      // Predicated region
      $region37: #{tpu_custom_call.1} parent=5 // pred_check
        _
      $region38: #{tpu_custom_call.1} parent=5 // pred_check_branch
        %238 = sbr.rel (%p235) target = $region40
      $region39: #{tpu_custom_call.1} parent=5 // pred_region
        %s239 = ssub.s32 %s19, 1
        %s240 = sand.u32 %s32, 1
        %s241 = scalar_lea.sflag [#allocation3], %s240
        %s242 = sand.u32 %s32, 1
        %s243 = smul.addr %s242, 16
        %s244 = scalar_lea.vmem [#allocation2], %s243
        // Predicated region
        $region41: #{tpu_custom_call.1} parent=39 // pred_check
          %p245 = pneg %p45
        $region42: #{tpu_custom_call.1} parent=39 // pred_check_branch
          %247 = sbr.rel (%p245) target = $region44
        $region43: #{tpu_custom_call.1} parent=39 // pred_region
          %248 = dma.done %s241, 256
        $region44: #{tpu_custom_call.1} parent=39 // pred_fallthru
          _
        // Predicated region
        $region45: #{tpu_custom_call.1} parent=39 // pred_check
          %p249 = pneg %p66
        $region46: #{tpu_custom_call.1} parent=39 // pred_check_branch
          %251 = sbr.rel (%p249) target = $region48
        $region47: #{tpu_custom_call.1} parent=39 // pred_region
          %252 = dma.done [#allocation6], 24576
        $region48: #{tpu_custom_call.1} parent=39 // pred_fallthru
          _
        // Predicated region
        $region49: #{tpu_custom_call.1} parent=39 // pred_check
          %p253 = pneg %p87
        $region50: #{tpu_custom_call.1} parent=39 // pred_check_branch
          %255 = sbr.rel (%p253) target = $region52
        $region51: #{tpu_custom_call.1} parent=39 // pred_region
          %256 = dma.done [#allocation6], 96
        $region52: #{tpu_custom_call.1} parent=39 // pred_fallthru
          _
        // Predicated region
        $region53: #{tpu_custom_call.1} parent=39 // pred_check
          %p257 = pneg %p108
        $region54: #{tpu_custom_call.1} parent=39 // pred_check_branch
          %259 = sbr.rel (%p257) target = $region56
        $region55: #{tpu_custom_call.1} parent=39 // pred_region
          %260 = dma.done [#allocation9], 8192
        $region56: #{tpu_custom_call.1} parent=39 // pred_fallthru
          _
        %s261 = sand.u32 %s32, 1
        %s262 = scalar_lea.sflag [#allocation3], %s261
        %s263 = sand.u32 %s32, 1
        %s264 = smul.addr %s263, 16
        %s265 = scalar_lea.vmem [#allocation2], %s264
        %p266 = pneg %p45
        %p267 = pneg %p42
        %p268 = pneg %p66
        %p269 = pneg %p63
        %p270 = pneg %p87
        %p271 = pneg %p84
        %p272 = pneg %p108
        %p273 = pneg %p105
        %p274 = pneg %p129
        %p275 = pneg %p126
        %p276 = pneg %p155
        %p277 = pneg %p152
        %s278 = sand.u32 %s142, 1
        %s279 = scalar_lea.sflag [#allocation4], %s278
        %s280 = sand.u32 %s142, 1
        %s281 = smul.addr %s280, 16
        %s282 = scalar_lea.vmem [#allocation10], %s281
        %v283 = vld [vmem:[%s244] sm:$0xff]
        %v284 = vld [vmem:[%s244 + $0x8] sm:$0xff]
        %v285 = vld [vmem:[#allocation5] sm:$0xff]
        %v286 = vld [vmem:[#allocation5 + $0x8] sm:$0xff]
        %v287 = vld [vmem:[#allocation5 + $0x10] sm:$0xff]
        %v288 = vld [vmem:[#allocation5 + $0x18] sm:$0xff]
        %v289 = vld [vmem:[#allocation5 + $0x20] sm:$0xff]
        %v290 = vld [vmem:[#allocation5 + $0x28] sm:$0xff]
        %v291 = vld [vmem:[#allocation5 + $0x30] sm:$0xff]
        %v292 = vld [vmem:[#allocation5 + $0x38] sm:$0xff]
        %v293 = vld [vmem:[#allocation5 + $0x40] sm:$0xff]
        %v294 = vld [vmem:[#allocation5 + $0x48] sm:$0xff]
        %v295 = vld [vmem:[#allocation5 + $0x50] sm:$0xff]
        %v296 = vld [vmem:[#allocation5 + $0x58] sm:$0xff]
        %v297 = vld [vmem:[#allocation5 + $0x60] sm:$0xff]
        %v298 = vld [vmem:[#allocation5 + $0x68] sm:$0xff]
        %v299 = vld [vmem:[#allocation5 + $0x70] sm:$0xff]
        %v300 = vld [vmem:[#allocation5 + $0x78] sm:$0xff]
        %v301 = vld [vmem:[#allocation5 + $0x80] sm:$0xff]
        %v302 = vld [vmem:[#allocation5 + $0x88] sm:$0xff]
        %v303 = vld [vmem:[#allocation5 + $0x90] sm:$0xff]
        %v304 = vld [vmem:[#allocation5 + $0x98] sm:$0xff]
        %v305 = vld [vmem:[#allocation5 + $0xa0] sm:$0xff]
        %v306 = vld [vmem:[#allocation5 + $0xa8] sm:$0xff]
        %v307 = vld [vmem:[#allocation5 + $0xb0] sm:$0xff]
        %v308 = vld [vmem:[#allocation5 + $0xb8] sm:$0xff]
        %v309 = vld [vmem:[#allocation5 + $0xc0] sm:$0xff]
        %v310 = vld [vmem:[#allocation5 + $0xc8] sm:$0xff]
        %v311 = vld [vmem:[#allocation5 + $0xd0] sm:$0xff]
        %v312 = vld [vmem:[#allocation5 + $0xd8] sm:$0xff]
        %v313 = vld [vmem:[#allocation5 + $0xe0] sm:$0xff]
        %v314 = vld [vmem:[#allocation5 + $0xe8] sm:$0xff]
        %v315 = vld [vmem:[#allocation5 + $0xf0] sm:$0xff]
        %v316 = vld [vmem:[#allocation5 + $0xf8] sm:$0xff]
        %v317 = vld [vmem:[#allocation5 + $0x100] sm:$0xff]
        %v318 = vld [vmem:[#allocation5 + $0x108] sm:$0xff]
        %v319 = vld [vmem:[#allocation5 + $0x110] sm:$0xff]
        %v320 = vld [vmem:[#allocation5 + $0x118] sm:$0xff]
        %v321 = vld [vmem:[#allocation5 + $0x120] sm:$0xff]
        %v322 = vld [vmem:[#allocation5 + $0x128] sm:$0xff]
        %v323 = vld [vmem:[#allocation5 + $0x130] sm:$0xff]
        %v324 = vld [vmem:[#allocation5 + $0x138] sm:$0xff]
        %v325 = vld [vmem:[#allocation5 + $0x140] sm:$0xff]
        %v326 = vld [vmem:[#allocation5 + $0x148] sm:$0xff]
        %v327 = vld [vmem:[#allocation5 + $0x150] sm:$0xff]
        %v328 = vld [vmem:[#allocation5 + $0x158] sm:$0xff]
        %v329 = vld [vmem:[#allocation5 + $0x160] sm:$0xff]
        %v330 = vld [vmem:[#allocation5 + $0x168] sm:$0xff]
        %v331 = vld [vmem:[#allocation5 + $0x170] sm:$0xff]
        %v332 = vld [vmem:[#allocation5 + $0x178] sm:$0xff]
        %v333 = vld [vmem:[#allocation5 + $0x180] sm:$0xff]
        %v334 = vld [vmem:[#allocation5 + $0x188] sm:$0xff]
        %v335 = vld [vmem:[#allocation5 + $0x190] sm:$0xff]
        %v336 = vld [vmem:[#allocation5 + $0x198] sm:$0xff]
        %v337 = vld [vmem:[#allocation5 + $0x1a0] sm:$0xff]
        %v338 = vld [vmem:[#allocation5 + $0x1a8] sm:$0xff]
        %v339 = vld [vmem:[#allocation5 + $0x1b0] sm:$0xff]
        %v340 = vld [vmem:[#allocation5 + $0x1b8] sm:$0xff]
        %v341 = vld [vmem:[#allocation5 + $0x1c0] sm:$0xff]
        %v342 = vld [vmem:[#allocation5 + $0x1c8] sm:$0xff]
        %v343 = vld [vmem:[#allocation5 + $0x1d0] sm:$0xff]
        %v344 = vld [vmem:[#allocation5 + $0x1d8] sm:$0xff]
        %v345 = vld [vmem:[#allocation5 + $0x1e0] sm:$0xff]
        %v346 = vld [vmem:[#allocation5 + $0x1e8] sm:$0xff]
        %v347 = vld [vmem:[#allocation5 + $0x1f0] sm:$0xff]
        %v348 = vld [vmem:[#allocation5 + $0x1f8] sm:$0xff]
        %v349 = vld [vmem:[#allocation5 + $0x200] sm:$0xff]
        %v350 = vld [vmem:[#allocation5 + $0x208] sm:$0xff]
        %v351 = vld [vmem:[#allocation5 + $0x210] sm:$0xff]
        %v352 = vld [vmem:[#allocation5 + $0x218] sm:$0xff]
        %v353 = vld [vmem:[#allocation5 + $0x220] sm:$0xff]
        %v354 = vld [vmem:[#allocation5 + $0x228] sm:$0xff]
        %v355 = vld [vmem:[#allocation5 + $0x230] sm:$0xff]
        %v356 = vld [vmem:[#allocation5 + $0x238] sm:$0xff]
        %v357 = vld [vmem:[#allocation5 + $0x240] sm:$0xff]
        %v358 = vld [vmem:[#allocation5 + $0x248] sm:$0xff]
        %v359 = vld [vmem:[#allocation5 + $0x250] sm:$0xff]
        %v360 = vld [vmem:[#allocation5 + $0x258] sm:$0xff]
        %v361 = vld [vmem:[#allocation5 + $0x260] sm:$0xff]
        %v362 = vld [vmem:[#allocation5 + $0x268] sm:$0xff]
        %v363 = vld [vmem:[#allocation5 + $0x270] sm:$0xff]
        %v364 = vld [vmem:[#allocation5 + $0x278] sm:$0xff]
        %v365 = vld [vmem:[#allocation5 + $0x280] sm:$0xff]
        %v366 = vld [vmem:[#allocation5 + $0x288] sm:$0xff]
        %v367 = vld [vmem:[#allocation5 + $0x290] sm:$0xff]
        %v368 = vld [vmem:[#allocation5 + $0x298] sm:$0xff]
        %v369 = vld [vmem:[#allocation5 + $0x2a0] sm:$0xff]
        %v370 = vld [vmem:[#allocation5 + $0x2a8] sm:$0xff]
        %v371 = vld [vmem:[#allocation5 + $0x2b0] sm:$0xff]
        %v372 = vld [vmem:[#allocation5 + $0x2b8] sm:$0xff]
        %v373 = vld [vmem:[#allocation5 + $0x2c0] sm:$0xff]
        %v374 = vld [vmem:[#allocation5 + $0x2c8] sm:$0xff]
        %v375 = vld [vmem:[#allocation5 + $0x2d0] sm:$0xff]
        %v376 = vld [vmem:[#allocation5 + $0x2d8] sm:$0xff]
        %v377 = vld [vmem:[#allocation5 + $0x2e0] sm:$0xff]
        %v378 = vld [vmem:[#allocation5 + $0x2e8] sm:$0xff]
        %v379 = vld [vmem:[#allocation5 + $0x2f0] sm:$0xff]
        %v380 = vld [vmem:[#allocation5 + $0x2f8] sm:$0xff]
        %v381 = vld [vmem:[#allocation5 + $0x300] sm:$0xff]
        %v382 = vld [vmem:[#allocation5 + $0x308] sm:$0xff]
        %v383 = vld [vmem:[#allocation5 + $0x310] sm:$0xff]
        %v384 = vld [vmem:[#allocation5 + $0x318] sm:$0xff]
        %v385 = vld [vmem:[#allocation5 + $0x320] sm:$0xff]
        %v386 = vld [vmem:[#allocation5 + $0x328] sm:$0xff]
        %v387 = vld [vmem:[#allocation5 + $0x330] sm:$0xff]
        %v388 = vld [vmem:[#allocation5 + $0x338] sm:$0xff]
        %v389 = vld [vmem:[#allocation5 + $0x340] sm:$0xff]
        %v390 = vld [vmem:[#allocation5 + $0x348] sm:$0xff]
        %v391 = vld [vmem:[#allocation5 + $0x350] sm:$0xff]
        %v392 = vld [vmem:[#allocation5 + $0x358] sm:$0xff]
        %v393 = vld [vmem:[#allocation5 + $0x360] sm:$0xff]
        %v394 = vld [vmem:[#allocation5 + $0x368] sm:$0xff]
        %v395 = vld [vmem:[#allocation5 + $0x370] sm:$0xff]
        %v396 = vld [vmem:[#allocation5 + $0x378] sm:$0xff]
        %v397 = vld [vmem:[#allocation5 + $0x380] sm:$0xff]
        %v398 = vld [vmem:[#allocation5 + $0x388] sm:$0xff]
        %v399 = vld [vmem:[#allocation5 + $0x390] sm:$0xff]
        %v400 = vld [vmem:[#allocation5 + $0x398] sm:$0xff]
        %v401 = vld [vmem:[#allocation5 + $0x3a0] sm:$0xff]
        %v402 = vld [vmem:[#allocation5 + $0x3a8] sm:$0xff]
        %v403 = vld [vmem:[#allocation5 + $0x3b0] sm:$0xff]
        %v404 = vld [vmem:[#allocation5 + $0x3b8] sm:$0xff]
        %v405 = vld [vmem:[#allocation5 + $0x3c0] sm:$0xff]
        %v406 = vld [vmem:[#allocation5 + $0x3c8] sm:$0xff]
        %v407 = vld [vmem:[#allocation5 + $0x3d0] sm:$0xff]
        %v408 = vld [vmem:[#allocation5 + $0x3d8] sm:$0xff]
        %v409 = vld [vmem:[#allocation5 + $0x3e0] sm:$0xff]
        %v410 = vld [vmem:[#allocation5 + $0x3e8] sm:$0xff]
        %v411 = vld [vmem:[#allocation5 + $0x3f0] sm:$0xff]
        %v412 = vld [vmem:[#allocation5 + $0x3f8] sm:$0xff]
        %v413 = vld [vmem:[#allocation5 + $0x400] sm:$0xff]
        %v414 = vld [vmem:[#allocation5 + $0x408] sm:$0xff]
        %v415 = vld [vmem:[#allocation5 + $0x410] sm:$0xff]
        %v416 = vld [vmem:[#allocation5 + $0x418] sm:$0xff]
        %v417 = vld [vmem:[#allocation5 + $0x420] sm:$0xff]
        %v418 = vld [vmem:[#allocation5 + $0x428] sm:$0xff]
        %v419 = vld [vmem:[#allocation5 + $0x430] sm:$0xff]
        %v420 = vld [vmem:[#allocation5 + $0x438] sm:$0xff]
        %v421 = vld [vmem:[#allocation5 + $0x440] sm:$0xff]
        %v422 = vld [vmem:[#allocation5 + $0x448] sm:$0xff]
        %v423 = vld [vmem:[#allocation5 + $0x450] sm:$0xff]
        %v424 = vld [vmem:[#allocation5 + $0x458] sm:$0xff]
        %v425 = vld [vmem:[#allocation5 + $0x460] sm:$0xff]
        %v426 = vld [vmem:[#allocation5 + $0x468] sm:$0xff]
        %v427 = vld [vmem:[#allocation5 + $0x470] sm:$0xff]
        %v428 = vld [vmem:[#allocation5 + $0x478] sm:$0xff]
        %v429 = vld [vmem:[#allocation5 + $0x480] sm:$0xff]
        %v430 = vld [vmem:[#allocation5 + $0x488] sm:$0xff]
        %v431 = vld [vmem:[#allocation5 + $0x490] sm:$0xff]
        %v432 = vld [vmem:[#allocation5 + $0x498] sm:$0xff]
        %v433 = vld [vmem:[#allocation5 + $0x4a0] sm:$0xff]
        %v434 = vld [vmem:[#allocation5 + $0x4a8] sm:$0xff]
        %v435 = vld [vmem:[#allocation5 + $0x4b0] sm:$0xff]
        %v436 = vld [vmem:[#allocation5 + $0x4b8] sm:$0xff]
        %v437 = vld [vmem:[#allocation5 + $0x4c0] sm:$0xff]
        %v438 = vld [vmem:[#allocation5 + $0x4c8] sm:$0xff]
        %v439 = vld [vmem:[#allocation5 + $0x4d0] sm:$0xff]
        %v440 = vld [vmem:[#allocation5 + $0x4d8] sm:$0xff]
        %v441 = vld [vmem:[#allocation5 + $0x4e0] sm:$0xff]
        %v442 = vld [vmem:[#allocation5 + $0x4e8] sm:$0xff]
        %v443 = vld [vmem:[#allocation5 + $0x4f0] sm:$0xff]
        %v444 = vld [vmem:[#allocation5 + $0x4f8] sm:$0xff]
        %v445 = vld [vmem:[#allocation5 + $0x500] sm:$0xff]
        %v446 = vld [vmem:[#allocation5 + $0x508] sm:$0xff]
        %v447 = vld [vmem:[#allocation5 + $0x510] sm:$0xff]
        %v448 = vld [vmem:[#allocation5 + $0x518] sm:$0xff]
        %v449 = vld [vmem:[#allocation5 + $0x520] sm:$0xff]
        %v450 = vld [vmem:[#allocation5 + $0x528] sm:$0xff]
        %v451 = vld [vmem:[#allocation5 + $0x530] sm:$0xff]
        %v452 = vld [vmem:[#allocation5 + $0x538] sm:$0xff]
        %v453 = vld [vmem:[#allocation5 + $0x540] sm:$0xff]
        %v454 = vld [vmem:[#allocation5 + $0x548] sm:$0xff]
        %v455 = vld [vmem:[#allocation5 + $0x550] sm:$0xff]
        %v456 = vld [vmem:[#allocation5 + $0x558] sm:$0xff]
        %v457 = vld [vmem:[#allocation5 + $0x560] sm:$0xff]
        %v458 = vld [vmem:[#allocation5 + $0x568] sm:$0xff]
        %v459 = vld [vmem:[#allocation5 + $0x570] sm:$0xff]
        %v460 = vld [vmem:[#allocation5 + $0x578] sm:$0xff]
        %v461 = vld [vmem:[#allocation5 + $0x580] sm:$0xff]
        %v462 = vld [vmem:[#allocation5 + $0x588] sm:$0xff]
        %v463 = vld [vmem:[#allocation5 + $0x590] sm:$0xff]
        %v464 = vld [vmem:[#allocation5 + $0x598] sm:$0xff]
        %v465 = vld [vmem:[#allocation5 + $0x5a0] sm:$0xff]
        %v466 = vld [vmem:[#allocation5 + $0x5a8] sm:$0xff]
        %v467 = vld [vmem:[#allocation5 + $0x5b0] sm:$0xff]
        %v468 = vld [vmem:[#allocation5 + $0x5b8] sm:$0xff]
        %v469 = vld [vmem:[#allocation5 + $0x5c0] sm:$0xff]
        %v470 = vld [vmem:[#allocation5 + $0x5c8] sm:$0xff]
        %v471 = vld [vmem:[#allocation5 + $0x5d0] sm:$0xff]
        %v472 = vld [vmem:[#allocation5 + $0x5d8] sm:$0xff]
        %v473 = vld [vmem:[#allocation5 + $0x5e0] sm:$0xff]
        %v474 = vld [vmem:[#allocation5 + $0x5e8] sm:$0xff]
        %v475 = vld [vmem:[#allocation5 + $0x5f0] sm:$0xff]
        %v476 = vld [vmem:[#allocation5 + $0x5f8] sm:$0xff]
        %v477 = vld [vmem:[#allocation7] sm:$0x3f]
        %v479 = vlaneseq
        %v480 = vshrl.u32 %v479, 7
        %v481 = vsub.s32 0, %v480
        %v482 = vrot.slane %v477, %v481
        %v483 = vlaneseq
        %v484 = vshrl.u32 %v483, 7
        %v485 = vsub.s32 1, %v484
        %v486 = vrot.slane %v477, %v485
        %v487 = vlaneseq
        %v488 = vshrl.u32 %v487, 7
        %v489 = vsub.s32 2, %v488
        %v490 = vrot.slane %v477, %v489
        %v491 = vlaneseq
        %v492 = vshrl.u32 %v491, 7
        %v493 = vsub.s32 3, %v492
        %v494 = vrot.slane %v477, %v493
        %v495 = vlaneseq
        %v496 = vshrl.u32 %v495, 7
        %v497 = vsub.s32 4, %v496
        %v498 = vrot.slane %v477, %v497
        %v499 = vlaneseq
        %v500 = vshrl.u32 %v499, 7
        %v501 = vsub.s32 5, %v500
        %v502 = vrot.slane %v477, %v501
        %509 = vmatprep.subr.mxu0 %v376
        %510 = vmatpush1.msra.mxu0 %v375
        %511 = vmatprep.subr.mxu0 %v370
        %512 = vmatpush1.msra.mxu0 %v369
        %513 = vmatprep.subr.mxu0 %v364
        %514 = vmatpush1.msra.mxu0 %v363
        %515 = vmatprep.subr.mxu0 %v358
        %516 = vmatpush1.msra.mxu0 %v357
        %517 = vmatprep.subr.mxu0 %v352
        %518 = vmatpush1.msra.mxu0 %v351
        %519 = vmatprep.subr.mxu0 %v346
        %520 = vmatpush1.msra.mxu0 %v345
        %521 = vmatprep.subr.mxu0 %v340
        %522 = vmatpush1.msra.mxu0 %v339
        %523 = vmatprep.subr.mxu0 %v334
        %524 = vmatpush1.msra.mxu0 %v333
        %525 = vmatprep.subr.mxu0 %v328
        %526 = vmatpush1.msra.mxu0 %v327
        %527 = vmatprep.subr.mxu0 %v322
        %528 = vmatpush1.msra.mxu0 %v321
        %529 = vmatprep.subr.mxu0 %v316
        %530 = vmatpush1.msra.mxu0 %v315
        %531 = vmatprep.subr.mxu0 %v310
        %532 = vmatpush1.msra.mxu0 %v309
        %533 = vmatprep.subr.mxu0 %v304
        %534 = vmatpush1.msra.mxu0 %v303
        %535 = vmatprep.subr.mxu0 %v298
        %536 = vmatpush1.msra.mxu0 %v297
        %537 = vmatprep.subr.mxu0 %v292
        %538 = vmatpush1.msra.mxu0 %v291
        %539 = vmatprep.subr.mxu0 %v286
        %540 = vmatpush1.msra.mxu0 %v285
        %541 = vmatprep.subr.mxu0 %v472
        %542 = vmatpush2.msra.mxu0 %v471
        %543 = vmatprep.subr.mxu0 %v466
        %544 = vmatpush2.msra.mxu0 %v465
        %545 = vmatprep.subr.mxu0 %v460
        %546 = vmatpush2.msra.mxu0 %v459
        %547 = vmatprep.subr.mxu0 %v454
        %548 = vmatpush2.msra.mxu0 %v453
        %549 = vmatprep.subr.mxu0 %v448
        %550 = vmatpush2.msra.mxu0 %v447
        %551 = vmatprep.subr.mxu0 %v442
        %552 = vmatpush2.msra.mxu0 %v441
        %553 = vmatprep.subr.mxu0 %v436
        %554 = vmatpush2.msra.mxu0 %v435
        %555 = vmatprep.subr.mxu0 %v430
        %556 = vmatpush2.msra.mxu0 %v429
        %557 = vmatprep.subr.mxu0 %v424
        %558 = vmatpush2.msra.mxu0 %v423
        %559 = vmatprep.subr.mxu0 %v418
        %560 = vmatpush2.msra.mxu0 %v417
        %561 = vmatprep.subr.mxu0 %v412
        %562 = vmatpush2.msra.mxu0 %v411
        %563 = vmatprep.subr.mxu0 %v406
        %564 = vmatpush2.msra.mxu0 %v405
        %565 = vmatprep.subr.mxu0 %v400
        %566 = vmatpush2.msra.mxu0 %v399
        %567 = vmatprep.subr.mxu0 %v394
        %568 = vmatpush2.msra.mxu0 %v393
        %569 = vmatprep.subr.mxu0 %v388
        %570 = vmatpush2.msra.mxu0 %v387
        %571 = vmatprep.subr.mxu0 %v382
        %572 = vmatpush2.msra.mxu0 %v381
        %573 = vmatprep.mubr.f32.mxu0 %v284
        %574 = vmatmul.mubr.f32.gmra.mxu0 %v283
        %v575 = vpop.f32.mrf.mxu0
        %v576 = vadd.f32 %v482, %v575
        %v577 = vpop.f32.mrf.mxu0
        %v578 = vadd.f32 %v486, %v577
        %579 = vdwg.mxu0
        %580 = vmatprep.subr.mxu0 %v378
        %581 = vmatpush1.msra.mxu0 %v377
        %582 = vmatprep.subr.mxu0 %v372
        %583 = vmatpush1.msra.mxu0 %v371
        %584 = vmatprep.subr.mxu0 %v366
        %585 = vmatpush1.msra.mxu0 %v365
        %586 = vmatprep.subr.mxu0 %v360
        %587 = vmatpush1.msra.mxu0 %v359
        %588 = vmatprep.subr.mxu0 %v354
        %589 = vmatpush1.msra.mxu0 %v353
        %590 = vmatprep.subr.mxu0 %v348
        %591 = vmatpush1.msra.mxu0 %v347
        %592 = vmatprep.subr.mxu0 %v342
        %593 = vmatpush1.msra.mxu0 %v341
        %594 = vmatprep.subr.mxu0 %v336
        %595 = vmatpush1.msra.mxu0 %v335
        %596 = vmatprep.subr.mxu0 %v330
        %597 = vmatpush1.msra.mxu0 %v329
        %598 = vmatprep.subr.mxu0 %v324
        %599 = vmatpush1.msra.mxu0 %v323
        %600 = vmatprep.subr.mxu0 %v318
        %601 = vmatpush1.msra.mxu0 %v317
        %602 = vmatprep.subr.mxu0 %v312
        %603 = vmatpush1.msra.mxu0 %v311
        %604 = vmatprep.subr.mxu0 %v306
        %605 = vmatpush1.msra.mxu0 %v305
        %606 = vmatprep.subr.mxu0 %v300
        %607 = vmatpush1.msra.mxu0 %v299
        %608 = vmatprep.subr.mxu0 %v294
        %609 = vmatpush1.msra.mxu0 %v293
        %610 = vmatprep.subr.mxu0 %v288
        %611 = vmatpush1.msra.mxu0 %v287
        %612 = vmatprep.subr.mxu0 %v474
        %613 = vmatpush2.msra.mxu0 %v473
        %614 = vmatprep.subr.mxu0 %v468
        %615 = vmatpush2.msra.mxu0 %v467
        %616 = vmatprep.subr.mxu0 %v462
        %617 = vmatpush2.msra.mxu0 %v461
        %618 = vmatprep.subr.mxu0 %v456
        %619 = vmatpush2.msra.mxu0 %v455
        %620 = vmatprep.subr.mxu0 %v450
        %621 = vmatpush2.msra.mxu0 %v449
        %622 = vmatprep.subr.mxu0 %v444
        %623 = vmatpush2.msra.mxu0 %v443
        %624 = vmatprep.subr.mxu0 %v438
        %625 = vmatpush2.msra.mxu0 %v437
        %626 = vmatprep.subr.mxu0 %v432
        %627 = vmatpush2.msra.mxu0 %v431
        %628 = vmatprep.subr.mxu0 %v426
        %629 = vmatpush2.msra.mxu0 %v425
        %630 = vmatprep.subr.mxu0 %v420
        %631 = vmatpush2.msra.mxu0 %v419
        %632 = vmatprep.subr.mxu0 %v414
        %633 = vmatpush2.msra.mxu0 %v413
        %634 = vmatprep.subr.mxu0 %v408
        %635 = vmatpush2.msra.mxu0 %v407
        %636 = vmatprep.subr.mxu0 %v402
        %637 = vmatpush2.msra.mxu0 %v401
        %638 = vmatprep.subr.mxu0 %v396
        %639 = vmatpush2.msra.mxu0 %v395
        %640 = vmatprep.subr.mxu0 %v390
        %641 = vmatpush2.msra.mxu0 %v389
        %642 = vmatprep.subr.mxu0 %v384
        %643 = vmatpush2.msra.mxu0 %v383
        %644 = vmatprep.mubr.f32.mxu0 %v284
        %645 = vmatmul.mubr.f32.gmra.mxu0 %v283
        %v646 = vpop.f32.mrf.mxu0
        %v647 = vadd.f32 %v490, %v646
        %v648 = vpop.f32.mrf.mxu0
        %v649 = vadd.f32 %v494, %v648
        %650 = vdwg.mxu0
        %651 = vmatprep.subr.mxu0 %v380
        %652 = vmatpush1.msra.mxu0 %v379
        %653 = vmatprep.subr.mxu0 %v374
        %654 = vmatpush1.msra.mxu0 %v373
        %655 = vmatprep.subr.mxu0 %v368
        %656 = vmatpush1.msra.mxu0 %v367
        %657 = vmatprep.subr.mxu0 %v362
        %658 = vmatpush1.msra.mxu0 %v361
        %659 = vmatprep.subr.mxu0 %v356
        %660 = vmatpush1.msra.mxu0 %v355
        %661 = vmatprep.subr.mxu0 %v350
        %662 = vmatpush1.msra.mxu0 %v349
        %663 = vmatprep.subr.mxu0 %v344
        %664 = vmatpush1.msra.mxu0 %v343
        %665 = vmatprep.subr.mxu0 %v338
        %666 = vmatpush1.msra.mxu0 %v337
        %667 = vmatprep.subr.mxu0 %v332
        %668 = vmatpush1.msra.mxu0 %v331
        %669 = vmatprep.subr.mxu0 %v326
        %670 = vmatpush1.msra.mxu0 %v325
        %671 = vmatprep.subr.mxu0 %v320
        %672 = vmatpush1.msra.mxu0 %v319
        %673 = vmatprep.subr.mxu0 %v314
        %674 = vmatpush1.msra.mxu0 %v313
        %675 = vmatprep.subr.mxu0 %v308
        %676 = vmatpush1.msra.mxu0 %v307
        %677 = vmatprep.subr.mxu0 %v302
        %678 = vmatpush1.msra.mxu0 %v301
        %679 = vmatprep.subr.mxu0 %v296
        %680 = vmatpush1.msra.mxu0 %v295
        %681 = vmatprep.subr.mxu0 %v290
        %682 = vmatpush1.msra.mxu0 %v289
        %683 = vmatprep.subr.mxu0 %v476
        %684 = vmatpush2.msra.mxu0 %v475
        %685 = vmatprep.subr.mxu0 %v470
        %686 = vmatpush2.msra.mxu0 %v469
        %687 = vmatprep.subr.mxu0 %v464
        %688 = vmatpush2.msra.mxu0 %v463
        %689 = vmatprep.subr.mxu0 %v458
        %690 = vmatpush2.msra.mxu0 %v457
        %691 = vmatprep.subr.mxu0 %v452
        %692 = vmatpush2.msra.mxu0 %v451
        %693 = vmatprep.subr.mxu0 %v446
        %694 = vmatpush2.msra.mxu0 %v445
        %695 = vmatprep.subr.mxu0 %v440
        %696 = vmatpush2.msra.mxu0 %v439
        %697 = vmatprep.subr.mxu0 %v434
        %698 = vmatpush2.msra.mxu0 %v433
        %699 = vmatprep.subr.mxu0 %v428
        %700 = vmatpush2.msra.mxu0 %v427
        %701 = vmatprep.subr.mxu0 %v422
        %702 = vmatpush2.msra.mxu0 %v421
        %703 = vmatprep.subr.mxu0 %v416
        %704 = vmatpush2.msra.mxu0 %v415
        %705 = vmatprep.subr.mxu0 %v410
        %706 = vmatpush2.msra.mxu0 %v409
        %707 = vmatprep.subr.mxu0 %v404
        %708 = vmatpush2.msra.mxu0 %v403
        %709 = vmatprep.subr.mxu0 %v398
        %710 = vmatpush2.msra.mxu0 %v397
        %711 = vmatprep.subr.mxu0 %v392
        %712 = vmatpush2.msra.mxu0 %v391
        %713 = vmatprep.subr.mxu0 %v386
        %714 = vmatpush2.msra.mxu0 %v385
        %715 = vmatprep.mubr.f32.mxu0 %v284
        %716 = vmatmul.mubr.f32.gmra.mxu0 %v283
        %v717 = vpop.f32.mrf.mxu0
        %v718 = vadd.f32 %v498, %v717
        %v719 = vpop.f32.mrf.mxu0
        %v720 = vadd.f32 %v502, %v719
        %721 = vdwg.mxu0
        %vm722 = vcmask 523264
        %v724 = vsel %vm722, %v576, 0
        %v727 = vsel %vm722, %v647, 0
        %729 = vmatprep.subr.mxu0 0.0
        %730 = vmatpush1.xpose.msra.mxu0 0.0
        %731 = vmatprep.subr.mxu0 0.0
        %732 = vmatpush1.xpose.msra.mxu0 0.0
        %733 = vmatprep.subr.mxu0 0.0
        %734 = vmatpush1.xpose.msra.mxu0 0.0
        %735 = vmatprep.subr.mxu0 0.0
        %736 = vmatpush1.xpose.msra.mxu0 0.0
        %737 = vmatprep.subr.mxu0 0.0
        %738 = vmatpush1.xpose.msra.mxu0 0.0
        %739 = vmatprep.subr.mxu0 0.0
        %740 = vmatpush1.xpose.msra.mxu0 0.0
        %741 = vmatprep.subr.mxu0 0.0
        %742 = vmatpush1.xpose.msra.mxu0 0.0
        %743 = vmatprep.subr.mxu0 0.0
        %744 = vmatpush1.xpose.msra.mxu0 0.0
        %745 = vmatprep.subr.mxu0 0.0
        %746 = vmatpush1.xpose.msra.mxu0 0.0
        %747 = vmatprep.subr.mxu0 0.0
        %748 = vmatpush1.xpose.msra.mxu0 0.0
        %749 = vmatprep.subr.mxu0 0.0
        %750 = vmatpush1.xpose.msra.mxu0 0.0
        %751 = vmatprep.subr.mxu0 0.0
        %752 = vmatpush1.xpose.msra.mxu0 0.0
        %753 = vmatprep.subr.mxu0 0.0
        %754 = vmatpush1.xpose.msra.mxu0 0.0
        %755 = vmatprep.subr.mxu0 0.0
        %756 = vmatpush1.xpose.msra.mxu0 0.0
        %757 = vmatprep.subr.mxu0 0.0
        %758 = vmatpush1.xpose.msra.mxu0 0.0
        %759 = vmatprep.subr.mxu0 0.0
        %760 = vmatpush1.xpose.msra.mxu0 %v727
        %761 = vmatprep.subr.mxu0 0.0
        %762 = vmatpush2.xpose.msra.mxu0 0.0
        %763 = vmatprep.subr.mxu0 0.0
        %764 = vmatpush2.xpose.msra.mxu0 0.0
        %765 = vmatprep.subr.mxu0 0.0
        %766 = vmatpush2.xpose.msra.mxu0 0.0
        %767 = vmatprep.subr.mxu0 0.0
        %768 = vmatpush2.xpose.msra.mxu0 0.0
        %769 = vmatprep.subr.mxu0 0.0
        %770 = vmatpush2.xpose.msra.mxu0 0.0
        %771 = vmatprep.subr.mxu0 0.0
        %772 = vmatpush2.xpose.msra.mxu0 0.0
        %773 = vmatprep.subr.mxu0 0.0
        %774 = vmatpush2.xpose.msra.mxu0 0.0
        %775 = vmatprep.subr.mxu0 0.0
        %776 = vmatpush2.xpose.msra.mxu0 0.0
        %777 = vmatprep.subr.mxu0 0.0
        %778 = vmatpush2.xpose.msra.mxu0 0.0
        %779 = vmatprep.subr.mxu0 0.0
        %780 = vmatpush2.xpose.msra.mxu0 0.0
        %781 = vmatprep.subr.mxu0 0.0
        %782 = vmatpush2.xpose.msra.mxu0 0.0
        %783 = vmatprep.subr.mxu0 0.0
        %784 = vmatpush2.xpose.msra.mxu0 0.0
        %785 = vmatprep.subr.mxu0 0.0
        %786 = vmatpush2.xpose.msra.mxu0 0.0
        %787 = vmatprep.subr.mxu0 0.0
        %788 = vmatpush2.xpose.msra.mxu0 0.0
        %789 = vmatprep.subr.mxu0 0.0
        %790 = vmatpush2.xpose.msra.mxu0 0.0
        %791 = vmatprep.subr.mxu0 0.0
        %792 = vmatpush2.xpose.msra.mxu0 0.0
        %793 = vmatprep.mubr.f32.mxu0 0.0
        %794 = vmatmul.mubr.f32.gmra.mxu0 %v724
        %v795 = vpop.f32.mrf.mxu0
        %v796 = vadd.f32 0.0, %v795
        %v797 = vpop.f32.mrf.mxu0
        %798 = vdwg.mxu0
        %v799 = vmul.f32 %v796, 0.0625
        %vm800 = vcmask 64512
        %v801 = vsel %vm800, %v799, -inf
        %802 = vmax.xlane.f32.xlu0 %v801
        %v803 = vpop.xlane.xlu0 %802
        %v804 = vsub.f32 %v799, %v803
        %v805 = vmul.f32 %v804, 1.442695
        %v806 = vpow.pop %v805
        %v807 = vsel %vm800, %v806, 0.0
        %808 = vadd.xlane.f32.xlu0 %v807
        %v809 = vpop.xlane.xlu0 %808
        %v810 = vrcp.pop %v809
        %v811 = vmul.f32 %v806, %v810
        %v813 = vsel %vm800, %v811, 0
        %815 = vmatprep.subr.mxu0 0.0
        %816 = vmatpush1.msra.mxu0 0.0
        %817 = vmatprep.subr.mxu0 0.0
        %818 = vmatpush1.msra.mxu0 0.0
        %819 = vmatprep.subr.mxu0 0.0
        %820 = vmatpush1.msra.mxu0 0.0
        %821 = vmatprep.subr.mxu0 0.0
        %822 = vmatpush1.msra.mxu0 0.0
        %823 = vmatprep.subr.mxu0 0.0
        %824 = vmatpush1.msra.mxu0 0.0
        %825 = vmatprep.subr.mxu0 0.0
        %826 = vmatpush1.msra.mxu0 0.0
        %827 = vmatprep.subr.mxu0 0.0
        %828 = vmatpush1.msra.mxu0 0.0
        %829 = vmatprep.subr.mxu0 0.0
        %830 = vmatpush1.msra.mxu0 0.0
        %831 = vmatprep.subr.mxu0 0.0
        %832 = vmatpush1.msra.mxu0 0.0
        %833 = vmatprep.subr.mxu0 0.0
        %834 = vmatpush1.msra.mxu0 0.0
        %835 = vmatprep.subr.mxu0 0.0
        %836 = vmatpush1.msra.mxu0 0.0
        %837 = vmatprep.subr.mxu0 0.0
        %838 = vmatpush1.msra.mxu0 0.0
        %839 = vmatprep.subr.mxu0 0.0
        %840 = vmatpush1.msra.mxu0 0.0
        %841 = vmatprep.subr.mxu0 0.0
        %842 = vmatpush1.msra.mxu0 0.0
        %843 = vmatprep.subr.mxu0 0.0
        %844 = vmatpush1.msra.mxu0 0.0
        %845 = vmatprep.subr.mxu0 0.0
        %846 = vmatpush1.msra.mxu0 %v718
        %847 = vmatprep.subr.mxu0 0.0
        %848 = vmatpush2.msra.mxu0 0.0
        %849 = vmatprep.subr.mxu0 0.0
        %850 = vmatpush2.msra.mxu0 0.0
        %851 = vmatprep.subr.mxu0 0.0
        %852 = vmatpush2.msra.mxu0 0.0
        %853 = vmatprep.subr.mxu0 0.0
        %854 = vmatpush2.msra.mxu0 0.0
        %855 = vmatprep.subr.mxu0 0.0
        %856 = vmatpush2.msra.mxu0 0.0
        %857 = vmatprep.subr.mxu0 0.0
        %858 = vmatpush2.msra.mxu0 0.0
        %859 = vmatprep.subr.mxu0 0.0
        %860 = vmatpush2.msra.mxu0 0.0
        %861 = vmatprep.subr.mxu0 0.0
        %862 = vmatpush2.msra.mxu0 0.0
        %863 = vmatprep.subr.mxu0 0.0
        %864 = vmatpush2.msra.mxu0 0.0
        %865 = vmatprep.subr.mxu0 0.0
        %866 = vmatpush2.msra.mxu0 0.0
        %867 = vmatprep.subr.mxu0 0.0
        %868 = vmatpush2.msra.mxu0 0.0
        %869 = vmatprep.subr.mxu0 0.0
        %870 = vmatpush2.msra.mxu0 0.0
        %871 = vmatprep.subr.mxu0 0.0
        %872 = vmatpush2.msra.mxu0 0.0
        %873 = vmatprep.subr.mxu0 0.0
        %874 = vmatpush2.msra.mxu0 0.0
        %875 = vmatprep.subr.mxu0 0.0
        %876 = vmatpush2.msra.mxu0 0.0
        %877 = vmatprep.subr.mxu0 0.0
        %878 = vmatpush2.msra.mxu0 0.0
        %879 = vmatprep.mubr.f32.mxu0 0.0
        %880 = vmatmul.mubr.f32.gmra.mxu0 %v813
        %v881 = vpop.f32.mrf.mxu0
        %v882 = vadd.f32 0.0, %v881
        %v883 = vpop.f32.mrf.mxu0
        %884 = vdwg.mxu0
        %885 = vrot.lane.b32.xlu0 %v576, 64
        %v886 = vpop.permute.xlu0 %885
        %887 = vrot.lane.b32.xlu0 %v647, 64
        %v888 = vpop.permute.xlu0 %887
        %v889 = vsel %vm722, %v886, 0
        %v891 = vsel %vm722, %v888, 0
        %893 = vmatprep.subr.mxu0 0.0
        %894 = vmatpush1.xpose.msra.mxu0 0.0
        %895 = vmatprep.subr.mxu0 0.0
        %896 = vmatpush1.xpose.msra.mxu0 0.0
        %897 = vmatprep.subr.mxu0 0.0
        %898 = vmatpush1.xpose.msra.mxu0 0.0
        %899 = vmatprep.subr.mxu0 0.0
        %900 = vmatpush1.xpose.msra.mxu0 0.0
        %901 = vmatprep.subr.mxu0 0.0
        %902 = vmatpush1.xpose.msra.mxu0 0.0
        %903 = vmatprep.subr.mxu0 0.0
        %904 = vmatpush1.xpose.msra.mxu0 0.0
        %905 = vmatprep.subr.mxu0 0.0
        %906 = vmatpush1.xpose.msra.mxu0 0.0
        %907 = vmatprep.subr.mxu0 0.0
        %908 = vmatpush1.xpose.msra.mxu0 0.0
        %909 = vmatprep.subr.mxu0 0.0
        %910 = vmatpush1.xpose.msra.mxu0 0.0
        %911 = vmatprep.subr.mxu0 0.0
        %912 = vmatpush1.xpose.msra.mxu0 0.0
        %913 = vmatprep.subr.mxu0 0.0
        %914 = vmatpush1.xpose.msra.mxu0 0.0
        %915 = vmatprep.subr.mxu0 0.0
        %916 = vmatpush1.xpose.msra.mxu0 0.0
        %917 = vmatprep.subr.mxu0 0.0
        %918 = vmatpush1.xpose.msra.mxu0 0.0
        %919 = vmatprep.subr.mxu0 0.0
        %920 = vmatpush1.xpose.msra.mxu0 0.0
        %921 = vmatprep.subr.mxu0 0.0
        %922 = vmatpush1.xpose.msra.mxu0 0.0
        %923 = vmatprep.subr.mxu0 0.0
        %924 = vmatpush1.xpose.msra.mxu0 %v891
        %925 = vmatprep.subr.mxu0 0.0
        %926 = vmatpush2.xpose.msra.mxu0 0.0
        %927 = vmatprep.subr.mxu0 0.0
        %928 = vmatpush2.xpose.msra.mxu0 0.0
        %929 = vmatprep.subr.mxu0 0.0
        %930 = vmatpush2.xpose.msra.mxu0 0.0
        %931 = vmatprep.subr.mxu0 0.0
        %932 = vmatpush2.xpose.msra.mxu0 0.0
        %933 = vmatprep.subr.mxu0 0.0
        %934 = vmatpush2.xpose.msra.mxu0 0.0
        %935 = vmatprep.subr.mxu0 0.0
        %936 = vmatpush2.xpose.msra.mxu0 0.0
        %937 = vmatprep.subr.mxu0 0.0
        %938 = vmatpush2.xpose.msra.mxu0 0.0
        %939 = vmatprep.subr.mxu0 0.0
        %940 = vmatpush2.xpose.msra.mxu0 0.0
        %941 = vmatprep.subr.mxu0 0.0
        %942 = vmatpush2.xpose.msra.mxu0 0.0
        %943 = vmatprep.subr.mxu0 0.0
        %944 = vmatpush2.xpose.msra.mxu0 0.0
        %945 = vmatprep.subr.mxu0 0.0
        %946 = vmatpush2.xpose.msra.mxu0 0.0
        %947 = vmatprep.subr.mxu0 0.0
        %948 = vmatpush2.xpose.msra.mxu0 0.0
        %949 = vmatprep.subr.mxu0 0.0
        %950 = vmatpush2.xpose.msra.mxu0 0.0
        %951 = vmatprep.subr.mxu0 0.0
        %952 = vmatpush2.xpose.msra.mxu0 0.0
        %953 = vmatprep.subr.mxu0 0.0
        %954 = vmatpush2.xpose.msra.mxu0 0.0
        %955 = vmatprep.subr.mxu0 0.0
        %956 = vmatpush2.xpose.msra.mxu0 0.0
        %957 = vmatprep.mubr.f32.mxu0 0.0
        %958 = vmatmul.mubr.f32.gmra.mxu0 %v889
        %v959 = vpop.f32.mrf.mxu0
        %v960 = vadd.f32 0.0, %v959
        %v961 = vpop.f32.mrf.mxu0
        %962 = vdwg.mxu0
        %v963 = vmul.f32 %v960, 0.0625
        %v964 = vsel %vm800, %v963, -inf
        %965 = vmax.xlane.f32.xlu0 %v964
        %v966 = vpop.xlane.xlu0 %965
        %v967 = vsub.f32 %v963, %v966
        %v968 = vmul.f32 %v967, 1.442695
        %v969 = vpow.pop %v968
        %v970 = vsel %vm800, %v969, 0.0
        %971 = vadd.xlane.f32.xlu0 %v970
        %v972 = vpop.xlane.xlu0 %971
        %v973 = vrcp.pop %v972
        %v974 = vmul.f32 %v969, %v973
        %976 = vrot.lane.b32.xlu0 %v718, 64
        %v977 = vpop.permute.xlu0 %976
        %v980 = vsel %vm800, %v974, 0
        %982 = vmatprep.subr.mxu0 0.0
        %983 = vmatpush1.msra.mxu0 0.0
        %984 = vmatprep.subr.mxu0 0.0
        %985 = vmatpush1.msra.mxu0 0.0
        %986 = vmatprep.subr.mxu0 0.0
        %987 = vmatpush1.msra.mxu0 0.0
        %988 = vmatprep.subr.mxu0 0.0
        %989 = vmatpush1.msra.mxu0 0.0
        %990 = vmatprep.subr.mxu0 0.0
        %991 = vmatpush1.msra.mxu0 0.0
        %992 = vmatprep.subr.mxu0 0.0
        %993 = vmatpush1.msra.mxu0 0.0
        %994 = vmatprep.subr.mxu0 0.0
        %995 = vmatpush1.msra.mxu0 0.0
        %996 = vmatprep.subr.mxu0 0.0
        %997 = vmatpush1.msra.mxu0 0.0
        %998 = vmatprep.subr.mxu0 0.0
        %999 = vmatpush1.msra.mxu0 0.0
        %1000 = vmatprep.subr.mxu0 0.0
        %1001 = vmatpush1.msra.mxu0 0.0
        %1002 = vmatprep.subr.mxu0 0.0
        %1003 = vmatpush1.msra.mxu0 0.0
        %1004 = vmatprep.subr.mxu0 0.0
        %1005 = vmatpush1.msra.mxu0 0.0
        %1006 = vmatprep.subr.mxu0 0.0
        %1007 = vmatpush1.msra.mxu0 0.0
        %1008 = vmatprep.subr.mxu0 0.0
        %1009 = vmatpush1.msra.mxu0 0.0
        %1010 = vmatprep.subr.mxu0 0.0
        %1011 = vmatpush1.msra.mxu0 0.0
        %1012 = vmatprep.subr.mxu0 0.0
        %1013 = vmatpush1.msra.mxu0 %v977
        %1014 = vmatprep.subr.mxu0 0.0
        %1015 = vmatpush2.msra.mxu0 0.0
        %1016 = vmatprep.subr.mxu0 0.0
        %1017 = vmatpush2.msra.mxu0 0.0
        %1018 = vmatprep.subr.mxu0 0.0
        %1019 = vmatpush2.msra.mxu0 0.0
        %1020 = vmatprep.subr.mxu0 0.0
        %1021 = vmatpush2.msra.mxu0 0.0
        %1022 = vmatprep.subr.mxu0 0.0
        %1023 = vmatpush2.msra.mxu0 0.0
        %1024 = vmatprep.subr.mxu0 0.0
        %1025 = vmatpush2.msra.mxu0 0.0
        %1026 = vmatprep.subr.mxu0 0.0
        %1027 = vmatpush2.msra.mxu0 0.0
        %1028 = vmatprep.subr.mxu0 0.0
        %1029 = vmatpush2.msra.mxu0 0.0
        %1030 = vmatprep.subr.mxu0 0.0
        %1031 = vmatpush2.msra.mxu0 0.0
        %1032 = vmatprep.subr.mxu0 0.0
        %1033 = vmatpush2.msra.mxu0 0.0
        %1034 = vmatprep.subr.mxu0 0.0
        %1035 = vmatpush2.msra.mxu0 0.0
        %1036 = vmatprep.subr.mxu0 0.0
        %1037 = vmatpush2.msra.mxu0 0.0
        %1038 = vmatprep.subr.mxu0 0.0
        %1039 = vmatpush2.msra.mxu0 0.0
        %1040 = vmatprep.subr.mxu0 0.0
        %1041 = vmatpush2.msra.mxu0 0.0
        %1042 = vmatprep.subr.mxu0 0.0
        %1043 = vmatpush2.msra.mxu0 0.0
        %1044 = vmatprep.subr.mxu0 0.0
        %1045 = vmatpush2.msra.mxu0 0.0
        %1046 = vmatprep.mubr.f32.mxu0 0.0
        %1047 = vmatmul.mubr.f32.gmra.mxu0 %v980
        %v1048 = vpop.f32.mrf.mxu0
        %v1049 = vadd.f32 0.0, %v1048
        %v1050 = vpop.f32.mrf.mxu0
        %1051 = vdwg.mxu0
        %v1053 = vsel %vm722, %v578, 0
        %v1056 = vsel %vm722, %v649, 0
        %1058 = vmatprep.subr.mxu0 0.0
        %1059 = vmatpush1.xpose.msra.mxu0 0.0
        %1060 = vmatprep.subr.mxu0 0.0
        %1061 = vmatpush1.xpose.msra.mxu0 0.0
        %1062 = vmatprep.subr.mxu0 0.0
        %1063 = vmatpush1.xpose.msra.mxu0 0.0
        %1064 = vmatprep.subr.mxu0 0.0
        %1065 = vmatpush1.xpose.msra.mxu0 0.0
        %1066 = vmatprep.subr.mxu0 0.0
        %1067 = vmatpush1.xpose.msra.mxu0 0.0
        %1068 = vmatprep.subr.mxu0 0.0
        %1069 = vmatpush1.xpose.msra.mxu0 0.0
        %1070 = vmatprep.subr.mxu0 0.0
        %1071 = vmatpush1.xpose.msra.mxu0 0.0
        %1072 = vmatprep.subr.mxu0 0.0
        %1073 = vmatpush1.xpose.msra.mxu0 0.0
        %1074 = vmatprep.subr.mxu0 0.0
        %1075 = vmatpush1.xpose.msra.mxu0 0.0
        %1076 = vmatprep.subr.mxu0 0.0
        %1077 = vmatpush1.xpose.msra.mxu0 0.0
        %1078 = vmatprep.subr.mxu0 0.0
        %1079 = vmatpush1.xpose.msra.mxu0 0.0
        %1080 = vmatprep.subr.mxu0 0.0
        %1081 = vmatpush1.xpose.msra.mxu0 0.0
        %1082 = vmatprep.subr.mxu0 0.0
        %1083 = vmatpush1.xpose.msra.mxu0 0.0
        %1084 = vmatprep.subr.mxu0 0.0
        %1085 = vmatpush1.xpose.msra.mxu0 0.0
        %1086 = vmatprep.subr.mxu0 0.0
        %1087 = vmatpush1.xpose.msra.mxu0 0.0
        %1088 = vmatprep.subr.mxu0 0.0
        %1089 = vmatpush1.xpose.msra.mxu0 %v1056
        %1090 = vmatprep.subr.mxu0 0.0
        %1091 = vmatpush2.xpose.msra.mxu0 0.0
        %1092 = vmatprep.subr.mxu0 0.0
        %1093 = vmatpush2.xpose.msra.mxu0 0.0
        %1094 = vmatprep.subr.mxu0 0.0
        %1095 = vmatpush2.xpose.msra.mxu0 0.0
        %1096 = vmatprep.subr.mxu0 0.0
        %1097 = vmatpush2.xpose.msra.mxu0 0.0
        %1098 = vmatprep.subr.mxu0 0.0
        %1099 = vmatpush2.xpose.msra.mxu0 0.0
        %1100 = vmatprep.subr.mxu0 0.0
        %1101 = vmatpush2.xpose.msra.mxu0 0.0
        %1102 = vmatprep.subr.mxu0 0.0
        %1103 = vmatpush2.xpose.msra.mxu0 0.0
        %1104 = vmatprep.subr.mxu0 0.0
        %1105 = vmatpush2.xpose.msra.mxu0 0.0
        %1106 = vmatprep.subr.mxu0 0.0
        %1107 = vmatpush2.xpose.msra.mxu0 0.0
        %1108 = vmatprep.subr.mxu0 0.0
        %1109 = vmatpush2.xpose.msra.mxu0 0.0
        %1110 = vmatprep.subr.mxu0 0.0
        %1111 = vmatpush2.xpose.msra.mxu0 0.0
        %1112 = vmatprep.subr.mxu0 0.0
        %1113 = vmatpush2.xpose.msra.mxu0 0.0
        %1114 = vmatprep.subr.mxu0 0.0
        %1115 = vmatpush2.xpose.msra.mxu0 0.0
        %1116 = vmatprep.subr.mxu0 0.0
        %1117 = vmatpush2.xpose.msra.mxu0 0.0
        %1118 = vmatprep.subr.mxu0 0.0
        %1119 = vmatpush2.xpose.msra.mxu0 0.0
        %1120 = vmatprep.subr.mxu0 0.0
        %1121 = vmatpush2.xpose.msra.mxu0 0.0
        %1122 = vmatprep.mubr.f32.mxu0 0.0
        %1123 = vmatmul.mubr.f32.gmra.mxu0 %v1053
        %v1124 = vpop.f32.mrf.mxu0
        %v1125 = vadd.f32 0.0, %v1124
        %v1126 = vpop.f32.mrf.mxu0
        %1127 = vdwg.mxu0
        %v1128 = vmul.f32 %v1125, 0.0625
        %v1129 = vsel %vm800, %v1128, -inf
        %1130 = vmax.xlane.f32.xlu0 %v1129
        %v1131 = vpop.xlane.xlu0 %1130
        %v1132 = vsub.f32 %v1128, %v1131
        %v1133 = vmul.f32 %v1132, 1.442695
        %v1134 = vpow.pop %v1133
        %v1135 = vsel %vm800, %v1134, 0.0
        %1136 = vadd.xlane.f32.xlu0 %v1135
        %v1137 = vpop.xlane.xlu0 %1136
        %v1138 = vrcp.pop %v1137
        %v1139 = vmul.f32 %v1134, %v1138
        %v1141 = vsel %vm800, %v1139, 0
        %1143 = vmatprep.subr.mxu0 0.0
        %1144 = vmatpush1.msra.mxu0 0.0
        %1145 = vmatprep.subr.mxu0 0.0
        %1146 = vmatpush1.msra.mxu0 0.0
        %1147 = vmatprep.subr.mxu0 0.0
        %1148 = vmatpush1.msra.mxu0 0.0
        %1149 = vmatprep.subr.mxu0 0.0
        %1150 = vmatpush1.msra.mxu0 0.0
        %1151 = vmatprep.subr.mxu0 0.0
        %1152 = vmatpush1.msra.mxu0 0.0
        %1153 = vmatprep.subr.mxu0 0.0
        %1154 = vmatpush1.msra.mxu0 0.0
        %1155 = vmatprep.subr.mxu0 0.0
        %1156 = vmatpush1.msra.mxu0 0.0
        %1157 = vmatprep.subr.mxu0 0.0
        %1158 = vmatpush1.msra.mxu0 0.0
        %1159 = vmatprep.subr.mxu0 0.0
        %1160 = vmatpush1.msra.mxu0 0.0
        %1161 = vmatprep.subr.mxu0 0.0
        %1162 = vmatpush1.msra.mxu0 0.0
        %1163 = vmatprep.subr.mxu0 0.0
        %1164 = vmatpush1.msra.mxu0 0.0
        %1165 = vmatprep.subr.mxu0 0.0
        %1166 = vmatpush1.msra.mxu0 0.0
        %1167 = vmatprep.subr.mxu0 0.0
        %1168 = vmatpush1.msra.mxu0 0.0
        %1169 = vmatprep.subr.mxu0 0.0
        %1170 = vmatpush1.msra.mxu0 0.0
        %1171 = vmatprep.subr.mxu0 0.0
        %1172 = vmatpush1.msra.mxu0 0.0
        %1173 = vmatprep.subr.mxu0 0.0
        %1174 = vmatpush1.msra.mxu0 %v720
        %1175 = vmatprep.subr.mxu0 0.0
        %1176 = vmatpush2.msra.mxu0 0.0
        %1177 = vmatprep.subr.mxu0 0.0
        %1178 = vmatpush2.msra.mxu0 0.0
        %1179 = vmatprep.subr.mxu0 0.0
        %1180 = vmatpush2.msra.mxu0 0.0
        %1181 = vmatprep.subr.mxu0 0.0
        %1182 = vmatpush2.msra.mxu0 0.0
        %1183 = vmatprep.subr.mxu0 0.0
        %1184 = vmatpush2.msra.mxu0 0.0
        %1185 = vmatprep.subr.mxu0 0.0
        %1186 = vmatpush2.msra.mxu0 0.0
        %1187 = vmatprep.subr.mxu0 0.0
        %1188 = vmatpush2.msra.mxu0 0.0
        %1189 = vmatprep.subr.mxu0 0.0
        %1190 = vmatpush2.msra.mxu0 0.0
        %1191 = vmatprep.subr.mxu0 0.0
        %1192 = vmatpush2.msra.mxu0 0.0
        %1193 = vmatprep.subr.mxu0 0.0
        %1194 = vmatpush2.msra.mxu0 0.0
        %1195 = vmatprep.subr.mxu0 0.0
        %1196 = vmatpush2.msra.mxu0 0.0
        %1197 = vmatprep.subr.mxu0 0.0
        %1198 = vmatpush2.msra.mxu0 0.0
        %1199 = vmatprep.subr.mxu0 0.0
        %1200 = vmatpush2.msra.mxu0 0.0
        %1201 = vmatprep.subr.mxu0 0.0
        %1202 = vmatpush2.msra.mxu0 0.0
        %1203 = vmatprep.subr.mxu0 0.0
        %1204 = vmatpush2.msra.mxu0 0.0
        %1205 = vmatprep.subr.mxu0 0.0
        %1206 = vmatpush2.msra.mxu0 0.0
        %1207 = vmatprep.mubr.f32.mxu0 0.0
        %1208 = vmatmul.mubr.f32.gmra.mxu0 %v1141
        %v1209 = vpop.f32.mrf.mxu0
        %v1210 = vadd.f32 0.0, %v1209
        %v1211 = vpop.f32.mrf.mxu0
        %1212 = vdwg.mxu0
        %1213 = vrot.lane.b32.xlu0 %v578, 64
        %v1214 = vpop.permute.xlu0 %1213
        %1215 = vrot.lane.b32.xlu0 %v649, 64
        %v1216 = vpop.permute.xlu0 %1215
        %v1217 = vsel %vm722, %v1214, 0
        %v1219 = vsel %vm722, %v1216, 0
        %1221 = vmatprep.subr.mxu0 0.0
        %1222 = vmatpush1.xpose.msra.mxu0 0.0
        %1223 = vmatprep.subr.mxu0 0.0
        %1224 = vmatpush1.xpose.msra.mxu0 0.0
        %1225 = vmatprep.subr.mxu0 0.0
        %1226 = vmatpush1.xpose.msra.mxu0 0.0
        %1227 = vmatprep.subr.mxu0 0.0
        %1228 = vmatpush1.xpose.msra.mxu0 0.0
        %1229 = vmatprep.subr.mxu0 0.0
        %1230 = vmatpush1.xpose.msra.mxu0 0.0
        %1231 = vmatprep.subr.mxu0 0.0
        %1232 = vmatpush1.xpose.msra.mxu0 0.0
        %1233 = vmatprep.subr.mxu0 0.0
        %1234 = vmatpush1.xpose.msra.mxu0 0.0
        %1235 = vmatprep.subr.mxu0 0.0
        %1236 = vmatpush1.xpose.msra.mxu0 0.0
        %1237 = vmatprep.subr.mxu0 0.0
        %1238 = vmatpush1.xpose.msra.mxu0 0.0
        %1239 = vmatprep.subr.mxu0 0.0
        %1240 = vmatpush1.xpose.msra.mxu0 0.0
        %1241 = vmatprep.subr.mxu0 0.0
        %1242 = vmatpush1.xpose.msra.mxu0 0.0
        %1243 = vmatprep.subr.mxu0 0.0
        %1244 = vmatpush1.xpose.msra.mxu0 0.0
        %1245 = vmatprep.subr.mxu0 0.0
        %1246 = vmatpush1.xpose.msra.mxu0 0.0
        %1247 = vmatprep.subr.mxu0 0.0
        %1248 = vmatpush1.xpose.msra.mxu0 0.0
        %1249 = vmatprep.subr.mxu0 0.0
        %1250 = vmatpush1.xpose.msra.mxu0 0.0
        %1251 = vmatprep.subr.mxu0 0.0
        %1252 = vmatpush1.xpose.msra.mxu0 %v1219
        %1253 = vmatprep.subr.mxu0 0.0
        %1254 = vmatpush2.xpose.msra.mxu0 0.0
        %1255 = vmatprep.subr.mxu0 0.0
        %1256 = vmatpush2.xpose.msra.mxu0 0.0
        %1257 = vmatprep.subr.mxu0 0.0
        %1258 = vmatpush2.xpose.msra.mxu0 0.0
        %1259 = vmatprep.subr.mxu0 0.0
        %1260 = vmatpush2.xpose.msra.mxu0 0.0
        %1261 = vmatprep.subr.mxu0 0.0
        %1262 = vmatpush2.xpose.msra.mxu0 0.0
        %1263 = vmatprep.subr.mxu0 0.0
        %1264 = vmatpush2.xpose.msra.mxu0 0.0
        %1265 = vmatprep.subr.mxu0 0.0
        %1266 = vmatpush2.xpose.msra.mxu0 0.0
        %1267 = vmatprep.subr.mxu0 0.0
        %1268 = vmatpush2.xpose.msra.mxu0 0.0
        %1269 = vmatprep.subr.mxu0 0.0
        %1270 = vmatpush2.xpose.msra.mxu0 0.0
        %1271 = vmatprep.subr.mxu0 0.0
        %1272 = vmatpush2.xpose.msra.mxu0 0.0
        %1273 = vmatprep.subr.mxu0 0.0
        %1274 = vmatpush2.xpose.msra.mxu0 0.0
        %1275 = vmatprep.subr.mxu0 0.0
        %1276 = vmatpush2.xpose.msra.mxu0 0.0
        %1277 = vmatprep.subr.mxu0 0.0
        %1278 = vmatpush2.xpose.msra.mxu0 0.0
        %1279 = vmatprep.subr.mxu0 0.0
        %1280 = vmatpush2.xpose.msra.mxu0 0.0
        %1281 = vmatprep.subr.mxu0 0.0
        %1282 = vmatpush2.xpose.msra.mxu0 0.0
        %1283 = vmatprep.subr.mxu0 0.0
        %1284 = vmatpush2.xpose.msra.mxu0 0.0
        %1285 = vmatprep.mubr.f32.mxu0 0.0
        %1286 = vmatmul.mubr.f32.gmra.mxu0 %v1217
        %v1287 = vpop.f32.mrf.mxu0
        %v1288 = vadd.f32 0.0, %v1287
        %v1289 = vpop.f32.mrf.mxu0
        %1290 = vdwg.mxu0
        %v1291 = vmul.f32 %v1288, 0.0625
        %v1292 = vsel %vm800, %v1291, -inf
        %1293 = vmax.xlane.f32.xlu0 %v1292
        %v1294 = vpop.xlane.xlu0 %1293
        %v1295 = vsub.f32 %v1291, %v1294
        %v1296 = vmul.f32 %v1295, 1.442695
        %v1297 = vpow.pop %v1296
        %v1298 = vsel %vm800, %v1297, 0.0
        %1299 = vadd.xlane.f32.xlu0 %v1298
        %v1300 = vpop.xlane.xlu0 %1299
        %v1301 = vrcp.pop %v1300
        %v1302 = vmul.f32 %v1297, %v1301
        %1304 = vrot.lane.b32.xlu0 %v720, 64
        %v1305 = vpop.permute.xlu0 %1304
        %v1308 = vsel %vm800, %v1302, 0
        %1310 = vmatprep.subr.mxu0 0.0
        %1311 = vmatpush1.msra.mxu0 0.0
        %1312 = vmatprep.subr.mxu0 0.0
        %1313 = vmatpush1.msra.mxu0 0.0
        %1314 = vmatprep.subr.mxu0 0.0
        %1315 = vmatpush1.msra.mxu0 0.0
        %1316 = vmatprep.subr.mxu0 0.0
        %1317 = vmatpush1.msra.mxu0 0.0
        %1318 = vmatprep.subr.mxu0 0.0
        %1319 = vmatpush1.msra.mxu0 0.0
        %1320 = vmatprep.subr.mxu0 0.0
        %1321 = vmatpush1.msra.mxu0 0.0
        %1322 = vmatprep.subr.mxu0 0.0
        %1323 = vmatpush1.msra.mxu0 0.0
        %1324 = vmatprep.subr.mxu0 0.0
        %1325 = vmatpush1.msra.mxu0 0.0
        %1326 = vmatprep.subr.mxu0 0.0
        %1327 = vmatpush1.msra.mxu0 0.0
        %1328 = vmatprep.subr.mxu0 0.0
        %1329 = vmatpush1.msra.mxu0 0.0
        %1330 = vmatprep.subr.mxu0 0.0
        %1331 = vmatpush1.msra.mxu0 0.0
        %1332 = vmatprep.subr.mxu0 0.0
        %1333 = vmatpush1.msra.mxu0 0.0
        %1334 = vmatprep.subr.mxu0 0.0
        %1335 = vmatpush1.msra.mxu0 0.0
        %1336 = vmatprep.subr.mxu0 0.0
        %1337 = vmatpush1.msra.mxu0 0.0
        %1338 = vmatprep.subr.mxu0 0.0
        %1339 = vmatpush1.msra.mxu0 0.0
        %1340 = vmatprep.subr.mxu0 0.0
        %1341 = vmatpush1.msra.mxu0 %v1305
        %1342 = vmatprep.subr.mxu0 0.0
        %1343 = vmatpush2.msra.mxu0 0.0
        %1344 = vmatprep.subr.mxu0 0.0
        %1345 = vmatpush2.msra.mxu0 0.0
        %1346 = vmatprep.subr.mxu0 0.0
        %1347 = vmatpush2.msra.mxu0 0.0
        %1348 = vmatprep.subr.mxu0 0.0
        %1349 = vmatpush2.msra.mxu0 0.0
        %1350 = vmatprep.subr.mxu0 0.0
        %1351 = vmatpush2.msra.mxu0 0.0
        %1352 = vmatprep.subr.mxu0 0.0
        %1353 = vmatpush2.msra.mxu0 0.0
        %1354 = vmatprep.subr.mxu0 0.0
        %1355 = vmatpush2.msra.mxu0 0.0
        %1356 = vmatprep.subr.mxu0 0.0
        %1357 = vmatpush2.msra.mxu0 0.0
        %1358 = vmatprep.subr.mxu0 0.0
        %1359 = vmatpush2.msra.mxu0 0.0
        %1360 = vmatprep.subr.mxu0 0.0
        %1361 = vmatpush2.msra.mxu0 0.0
        %1362 = vmatprep.subr.mxu0 0.0
        %1363 = vmatpush2.msra.mxu0 0.0
        %1364 = vmatprep.subr.mxu0 0.0
        %1365 = vmatpush2.msra.mxu0 0.0
        %1366 = vmatprep.subr.mxu0 0.0
        %1367 = vmatpush2.msra.mxu0 0.0
        %1368 = vmatprep.subr.mxu0 0.0
        %1369 = vmatpush2.msra.mxu0 0.0
        %1370 = vmatprep.subr.mxu0 0.0
        %1371 = vmatpush2.msra.mxu0 0.0
        %1372 = vmatprep.subr.mxu0 0.0
        %1373 = vmatpush2.msra.mxu0 0.0
        %1374 = vmatprep.mubr.f32.mxu0 0.0
        %1375 = vmatmul.mubr.f32.gmra.mxu0 %v1308
        %v1376 = vpop.f32.mrf.mxu0
        %v1377 = vadd.f32 0.0, %v1376
        %v1378 = vpop.f32.mrf.mxu0
        %1379 = vdwg.mxu0
        %1381 = vrot.lane.b32.xlu0 %v1049, 64
        %v1382 = vpop.permute.xlu0 %1381
        %1385 = vrot.lane.b32.xlu0 %v1377, 64
        %v1386 = vpop.permute.xlu0 %1385
        %v1388 = vsel %vm722, %v882, %v1382
        %v1389 = vsel %vm722, %v1210, %v1386
        %v1390 = vld [vmem:[#allocation8] sm:$0xff]
        %v1391 = vld [vmem:[#allocation8 + $0x8] sm:$0xff]
        %v1392 = vld [vmem:[#allocation8 + $0x10] sm:$0xff]
        %v1393 = vld [vmem:[#allocation8 + $0x18] sm:$0xff]
        %v1394 = vld [vmem:[#allocation8 + $0x20] sm:$0xff]
        %v1395 = vld [vmem:[#allocation8 + $0x28] sm:$0xff]
        %v1396 = vld [vmem:[#allocation8 + $0x30] sm:$0xff]
        %v1397 = vld [vmem:[#allocation8 + $0x38] sm:$0xff]
        %v1398 = vld [vmem:[#allocation8 + $0x40] sm:$0xff]
        %v1399 = vld [vmem:[#allocation8 + $0x48] sm:$0xff]
        %v1400 = vld [vmem:[#allocation8 + $0x50] sm:$0xff]
        %v1401 = vld [vmem:[#allocation8 + $0x58] sm:$0xff]
        %v1402 = vld [vmem:[#allocation8 + $0x60] sm:$0xff]
        %v1403 = vld [vmem:[#allocation8 + $0x68] sm:$0xff]
        %v1404 = vld [vmem:[#allocation8 + $0x70] sm:$0xff]
        %v1405 = vld [vmem:[#allocation8 + $0x78] sm:$0xff]
        %v1406 = vld [vmem:[#allocation8 + $0x80] sm:$0xff]
        %v1407 = vld [vmem:[#allocation8 + $0x88] sm:$0xff]
        %v1408 = vld [vmem:[#allocation8 + $0x90] sm:$0xff]
        %v1409 = vld [vmem:[#allocation8 + $0x98] sm:$0xff]
        %v1410 = vld [vmem:[#allocation8 + $0xa0] sm:$0xff]
        %v1411 = vld [vmem:[#allocation8 + $0xa8] sm:$0xff]
        %v1412 = vld [vmem:[#allocation8 + $0xb0] sm:$0xff]
        %v1413 = vld [vmem:[#allocation8 + $0xb8] sm:$0xff]
        %v1414 = vld [vmem:[#allocation8 + $0xc0] sm:$0xff]
        %v1415 = vld [vmem:[#allocation8 + $0xc8] sm:$0xff]
        %v1416 = vld [vmem:[#allocation8 + $0xd0] sm:$0xff]
        %v1417 = vld [vmem:[#allocation8 + $0xd8] sm:$0xff]
        %v1418 = vld [vmem:[#allocation8 + $0xe0] sm:$0xff]
        %v1419 = vld [vmem:[#allocation8 + $0xe8] sm:$0xff]
        %v1420 = vld [vmem:[#allocation8 + $0xf0] sm:$0xff]
        %v1421 = vld [vmem:[#allocation8 + $0xf8] sm:$0xff]
        %v1422 = vld [vmem:[#allocation8 + $0x100] sm:$0xff]
        %v1423 = vld [vmem:[#allocation8 + $0x108] sm:$0xff]
        %v1424 = vld [vmem:[#allocation8 + $0x110] sm:$0xff]
        %v1425 = vld [vmem:[#allocation8 + $0x118] sm:$0xff]
        %v1426 = vld [vmem:[#allocation8 + $0x120] sm:$0xff]
        %v1427 = vld [vmem:[#allocation8 + $0x128] sm:$0xff]
        %v1428 = vld [vmem:[#allocation8 + $0x130] sm:$0xff]
        %v1429 = vld [vmem:[#allocation8 + $0x138] sm:$0xff]
        %v1430 = vld [vmem:[#allocation8 + $0x140] sm:$0xff]
        %v1431 = vld [vmem:[#allocation8 + $0x148] sm:$0xff]
        %v1432 = vld [vmem:[#allocation8 + $0x150] sm:$0xff]
        %v1433 = vld [vmem:[#allocation8 + $0x158] sm:$0xff]
        %v1434 = vld [vmem:[#allocation8 + $0x160] sm:$0xff]
        %v1435 = vld [vmem:[#allocation8 + $0x168] sm:$0xff]
        %v1436 = vld [vmem:[#allocation8 + $0x170] sm:$0xff]
        %v1437 = vld [vmem:[#allocation8 + $0x178] sm:$0xff]
        %v1438 = vld [vmem:[#allocation8 + $0x180] sm:$0xff]
        %v1439 = vld [vmem:[#allocation8 + $0x188] sm:$0xff]
        %v1440 = vld [vmem:[#allocation8 + $0x190] sm:$0xff]
        %v1441 = vld [vmem:[#allocation8 + $0x198] sm:$0xff]
        %v1442 = vld [vmem:[#allocation8 + $0x1a0] sm:$0xff]
        %v1443 = vld [vmem:[#allocation8 + $0x1a8] sm:$0xff]
        %v1444 = vld [vmem:[#allocation8 + $0x1b0] sm:$0xff]
        %v1445 = vld [vmem:[#allocation8 + $0x1b8] sm:$0xff]
        %v1446 = vld [vmem:[#allocation8 + $0x1c0] sm:$0xff]
        %v1447 = vld [vmem:[#allocation8 + $0x1c8] sm:$0xff]
        %v1448 = vld [vmem:[#allocation8 + $0x1d0] sm:$0xff]
        %v1449 = vld [vmem:[#allocation8 + $0x1d8] sm:$0xff]
        %v1450 = vld [vmem:[#allocation8 + $0x1e0] sm:$0xff]
        %v1451 = vld [vmem:[#allocation8 + $0x1e8] sm:$0xff]
        %v1452 = vld [vmem:[#allocation8 + $0x1f0] sm:$0xff]
        %v1453 = vld [vmem:[#allocation8 + $0x1f8] sm:$0xff]
        %v1454 = vld [vmem:[%s4] sm:$0x3]
        %v1456 = vlaneseq
        %v1457 = vshrl.u32 %v1456, 7
        %v1458 = vsub.s32 0, %v1457
        %v1459 = vrot.slane %v1454, %v1458
        %v1460 = vlaneseq
        %v1461 = vshrl.u32 %v1460, 7
        %v1462 = vsub.s32 1, %v1461
        %v1463 = vrot.slane %v1454, %v1462
        %1466 = vmatprep.subr.mxu0 %v1421
        %1467 = vmatpush1.msra.mxu0 %v1420
        %1468 = vmatprep.subr.mxu0 %v1419
        %1469 = vmatpush1.msra.mxu0 %v1418
        %1470 = vmatprep.subr.mxu0 %v1417
        %1471 = vmatpush1.msra.mxu0 %v1416
        %1472 = vmatprep.subr.mxu0 %v1415
        %1473 = vmatpush1.msra.mxu0 %v1414
        %1474 = vmatprep.subr.mxu0 %v1413
        %1475 = vmatpush1.msra.mxu0 %v1412
        %1476 = vmatprep.subr.mxu0 %v1411
        %1477 = vmatpush1.msra.mxu0 %v1410
        %1478 = vmatprep.subr.mxu0 %v1409
        %1479 = vmatpush1.msra.mxu0 %v1408
        %1480 = vmatprep.subr.mxu0 %v1407
        %1481 = vmatpush1.msra.mxu0 %v1406
        %1482 = vmatprep.subr.mxu0 %v1405
        %1483 = vmatpush1.msra.mxu0 %v1404
        %1484 = vmatprep.subr.mxu0 %v1403
        %1485 = vmatpush1.msra.mxu0 %v1402
        %1486 = vmatprep.subr.mxu0 %v1401
        %1487 = vmatpush1.msra.mxu0 %v1400
        %1488 = vmatprep.subr.mxu0 %v1399
        %1489 = vmatpush1.msra.mxu0 %v1398
        %1490 = vmatprep.subr.mxu0 %v1397
        %1491 = vmatpush1.msra.mxu0 %v1396
        %1492 = vmatprep.subr.mxu0 %v1395
        %1493 = vmatpush1.msra.mxu0 %v1394
        %1494 = vmatprep.subr.mxu0 %v1393
        %1495 = vmatpush1.msra.mxu0 %v1392
        %1496 = vmatprep.subr.mxu0 %v1391
        %1497 = vmatpush1.msra.mxu0 %v1390
        %1498 = vmatprep.subr.mxu0 %v1453
        %1499 = vmatpush2.msra.mxu0 %v1452
        %1500 = vmatprep.subr.mxu0 %v1451
        %1501 = vmatpush2.msra.mxu0 %v1450
        %1502 = vmatprep.subr.mxu0 %v1449
        %1503 = vmatpush2.msra.mxu0 %v1448
        %1504 = vmatprep.subr.mxu0 %v1447
        %1505 = vmatpush2.msra.mxu0 %v1446
        %1506 = vmatprep.subr.mxu0 %v1445
        %1507 = vmatpush2.msra.mxu0 %v1444
        %1508 = vmatprep.subr.mxu0 %v1443
        %1509 = vmatpush2.msra.mxu0 %v1442
        %1510 = vmatprep.subr.mxu0 %v1441
        %1511 = vmatpush2.msra.mxu0 %v1440
        %1512 = vmatprep.subr.mxu0 %v1439
        %1513 = vmatpush2.msra.mxu0 %v1438
        %1514 = vmatprep.subr.mxu0 %v1437
        %1515 = vmatpush2.msra.mxu0 %v1436
        %1516 = vmatprep.subr.mxu0 %v1435
        %1517 = vmatpush2.msra.mxu0 %v1434
        %1518 = vmatprep.subr.mxu0 %v1433
        %1519 = vmatpush2.msra.mxu0 %v1432
        %1520 = vmatprep.subr.mxu0 %v1431
        %1521 = vmatpush2.msra.mxu0 %v1430
        %1522 = vmatprep.subr.mxu0 %v1429
        %1523 = vmatpush2.msra.mxu0 %v1428
        %1524 = vmatprep.subr.mxu0 %v1427
        %1525 = vmatpush2.msra.mxu0 %v1426
        %1526 = vmatprep.subr.mxu0 %v1425
        %1527 = vmatpush2.msra.mxu0 %v1424
        %1528 = vmatprep.subr.mxu0 %v1423
        %1529 = vmatpush2.msra.mxu0 %v1422
        %1530 = vmatprep.mubr.f32.mxu0 %v1389
        %1531 = vmatmul.mubr.f32.gmra.mxu0 %v1388
        %v1532 = vpop.f32.mrf.mxu0
        %v1533 = vadd.f32 %v1459, %v1532
        %v1534 = vpop.f32.mrf.mxu0
        %v1535 = vadd.f32 %v1463, %v1534
        %1536 = vdwg.mxu0
        %1537 = vst [vmem:[%s282] sm:$0xff] %v1533
        %1538 = vst [vmem:[%s282 + $0x8] sm:$0xff] %v1535
        %s1539 = sand.u32 %s142, 1
        %s1540 = scalar_lea.sflag [#allocation4], %s1539
        %s1541 = sand.u32 %s142, 1
        %s1542 = smul.addr %s1541, 16
        %s1543 = scalar_lea.vmem [#allocation10], %s1542
        // Predicated region
        $region57: #{tpu_custom_call.1} parent=39 // pred_check
          %p1544 = pneg %p152
        $region58: #{tpu_custom_call.1} parent=39 // pred_check_branch
          %1546 = sbr.rel (%p1544) target = $region60
        $region59: #{tpu_custom_call.1} parent=39 // pred_region
          %s1548 = ssub.s32 256, 256
          %1549 = vsyncadd %s1540, %s1548
          %s1550 = smul.addr %s24, 2
          %s1551 = smul.addr %s1550, 128
          %s1552 = scalar_lea.hbm %s5, %s1551
          %s1554 = sshll.u32 %s1543, 4
          %s1555 = int_to_ptr.vmem [resolvable:$true] %s1554
          %1557 = dma.vmem_to_hbm [thread:$0]  %s1555, 256, %s1552, %s1540
        $region60: #{tpu_custom_call.1} parent=39 // pred_fallthru
          _
      $region40: #{tpu_custom_call.1} parent=5 // pred_fallthru
        _
      %p1558 = scmp.le.s32.totalorder 2, %s19
      // Predicated region
      $region61: #{tpu_custom_call.1} parent=5 // pred_check
        %p1559 = pneg %p1558
      $region62: #{tpu_custom_call.1} parent=5 // pred_check_branch
        %1561 = sbr.rel (%p1559) target = $region64
      $region63: #{tpu_custom_call.1} parent=5 // pred_region
        %s1562 = ssub.s32 %s19, 2
        // Predicated region
        $region65: #{tpu_custom_call.1} parent=63 // pred_check
          %p1563 = pneg %p158
        $region66: #{tpu_custom_call.1} parent=63 // pred_check_branch
          %1565 = sbr.rel (%p1563) target = $region68
        $region67: #{tpu_custom_call.1} parent=63 // pred_region
          %s1566 = sand.u32 %s143, 1
          %s1567 = scalar_lea.sflag [#allocation4], %s1566
          %s1568 = sand.u32 %s143, 1
          %s1569 = smul.addr %s1568, 16
          %s1570 = scalar_lea.vmem [#allocation10], %s1569
          %1571 = dma.done %s1567, 256
        $region68: #{tpu_custom_call.1} parent=63 // pred_fallthru
          _
      $region64: #{tpu_custom_call.1} parent=5 // pred_fallthru
        _
    $region6: #{tpu_custom_call.1} parent=1 // loop_footer
      %s23 = sadd.s32 1, %s19
    $region7: #{tpu_custom_call.1} parent=1 // loop_footer_branch
      %18 = sbr.rel target = $region3
    $region8: #{tpu_custom_call.1} parent=1 // loop_exit
      _
    %1572 = vsyncpa [#allocation3], 1
    %s1573 = scalar_lea.sflag [#allocation3], 1
    %1574 = vsyncpa %s1573, 1
    %1575 = vsyncpa [#allocation6], 1
    %1576 = vsyncpa [#allocation9], 1
    %1577 = vsyncpa [#allocation4], 1
    %s1578 = scalar_lea.sflag [#allocation4], 1
    %1579 = vsyncpa %s1578, 1

</llo_original>
